<compile_context>
chip_gen: v6e
topology: v6e:2x2x1
jax: 0.10.0
libtpu: 0.0.40
codegen_flags: <defaults>
</compile_context>

<pallas_src>
import jax
import jax.numpy as jnp
from jax import lax
from jax.experimental import pallas as pl
from jax.experimental.pallas import tpu as pltpu


def _round_up(x, m):
    return ((x + m - 1) // m) * m


def lstm_classifier_kernel(x_ref, wih_ref, whh_ref, b_ref, wout_ref, bout_ref,
                           out_ref, gates_scr):
    """x_ref:     (T*Bp, E)    bf16  time-major flattened embedded sequence
       wih_ref:   (E, 4*Hp)    bf16  input->gates  (gate order i, f, g, o)
       whh_ref:   (Hp, 4*Hp)   bf16  hidden->gates
       b_ref:     (1, 4*Hp)    f32   b_ih + b_hh (padded lanes = 0)
       wout_ref:  (Hp, Cp)     bf16  hidden2tag
       bout_ref:  (1, Cp)      f32   output bias (padded classes = -1e30)
       out_ref:   (Bp, Cp)     f32   log-softmax over classes
       gates_scr: (T*Bp, 4*Hp) f32   hoisted input projection."""
    Bp = out_ref.shape[0]
    Hp = whh_ref.shape[0]
    T = x_ref.shape[0] // Bp

    # (1) Hoisted input projection: one MXU matmul over all time steps,
    #     bias broadcast exactly once (not per iteration).
    gates_scr[...] = (
        jnp.dot(x_ref[...], wih_ref[...], preferred_element_type=jnp.float32)
        + b_ref[...])

    # (2) Serial recurrence: only h @ W_hh remains on the critical path.
    #     h/c state stays f32; only the MXU operand is cast to bf16.
    def step(t, carry):
        h, c = carry
        row = pl.multiple_of(t * Bp, Bp)
        gates = gates_scr[pl.ds(row, Bp), :] + jnp.dot(
            h.astype(jnp.bfloat16), whh_ref[...],
            preferred_element_type=jnp.float32)                    # (Bp, 4Hp) f32
        # PyTorch gate order: input, forget, cell (g), output.
        # Hp is a multiple of 128, so every gate slice is lane-aligned.
        i_g = jax.nn.sigmoid(gates[:, 0 * Hp:1 * Hp])
        f_g = jax.nn.sigmoid(gates[:, 1 * Hp:2 * Hp])
        g_g = jnp.tanh(gates[:, 2 * Hp:3 * Hp])
        o_g = jax.nn.sigmoid(gates[:, 3 * Hp:4 * Hp])
        c_new = f_g * c + i_g * g_g
        h_new = o_g * jnp.tanh(c_new)
        return h_new, c_new

    h0 = jnp.zeros((Bp, Hp), jnp.float32)
    c0 = jnp.zeros((Bp, Hp), jnp.float32)
    h_T, _ = lax.fori_loop(0, T, step, (h0, c0), unroll=True)

    # (3) hidden2tag + log-softmax over the class lanes.  Padded class lanes
    #     carry a -1e30 bias, so they contribute exp(~-inf) = 0 to the lse.
    logits = (jnp.dot(h_T.astype(jnp.bfloat16), wout_ref[...],
                      preferred_element_type=jnp.float32) + bout_ref[...])
    m = jnp.max(logits, axis=-1, keepdims=True)
    z = logits - m
    lse = jnp.log(jnp.sum(jnp.exp(z), axis=-1, keepdims=True))
    out_ref[...] = (z - lse).astype(out_ref.dtype)


def lstm_classifier_forward(sentence, emb_table, w_ih, w_hh, b_ih, b_hh,
                            w_out, b_out):
    """sentence: (B, T) int32 token ids (0 = padding row of emb_table).
       emb_table: (V, E) f32.
       PyTorch param shapes: w_ih (4H, E), w_hh (4H, H), b_* (4H,),
       w_out (C, H), b_out (C,).  Returns (B, C) f32 log-probs."""
    B, T = sentence.shape
    E = emb_table.shape[1]
    H = w_hh.shape[1]
    C = w_out.shape[0]

    Bp = _round_up(B, 8)      # fill sublanes
    Hp = _round_up(H, 128)    # lane-aligned gate blocks
    Cp = _round_up(C, 128)    # lane-dense output store

    # Embedding gather, produced time-major directly: (T, B, E) -> pad batch.
    x_tbe = jnp.take(emb_table, sentence.T, axis=0)
    x_tbe = jnp.pad(x_tbe, ((0, 0), (0, Bp - B), (0, 0)))
    x = x_tbe.reshape(T * Bp, E).astype(jnp.bfloat16)              # (T*Bp, E)

    # LSTM weights: transpose + per-gate pad H -> Hp, cast to bf16 for the MXU.
    wih4 = jnp.pad(w_ih.reshape(4, H, E), ((0, 0), (0, Hp - H), (0, 0)))
    wih_t = jnp.transpose(wih4, (2, 0, 1)).reshape(E, 4 * Hp).astype(jnp.bfloat16)
    whh4 = jnp.pad(w_hh.reshape(4, H, H), ((0, 0), (0, Hp - H), (0, Hp - H)))
    whh_t = jnp.transpose(whh4, (2, 0, 1)).reshape(Hp, 4 * Hp).astype(jnp.bfloat16)
    b4 = jnp.pad((b_ih + b_hh).reshape(4, H), ((0, 0), (0, Hp - H)))
    b = b4.reshape(1, 4 * Hp).astype(jnp.float32)

    # Output head.  Padded class lanes get bias -1e30 so log-softmax ignores them.
    wout_t = jnp.pad(jnp.transpose(w_out),
                     ((0, Hp - H), (0, Cp - C))).astype(jnp.bfloat16)
    bout = jnp.pad(b_out, (0, Cp - C),
                   constant_values=-1e30).reshape(1, Cp).astype(jnp.float32)

    vmem = pl.BlockSpec(memory_space=pltpu.MemorySpace.VMEM)
    out = pl.pallas_call(
        lstm_classifier_kernel,
        out_shape=jax.ShapeDtypeStruct((Bp, Cp), jnp.float32),
        in_specs=[vmem] * 6,
        out_specs=vmem,
        scratch_shapes=[pltpu.VMEM((T * Bp, 4 * Hp), jnp.float32)],
    )(x, wih_t, whh_t, b, wout_t, bout)
    return out[:B, :C]


if __name__ == "__main__":
    # Small, module-consistent shapes
    B, T = 2, 8           # batch, sequence length
    E, H = 32, 32         # embedding_dim, hidden_dim
    VOCAB, C = 50, 8      # vocab_size, tagset_size

    key = jax.random.PRNGKey(0)
    k_emb, k_unk, k_ih, k_hh, k_bih, k_bhh, k_wo, k_bo, k_tok = \
        jax.random.split(key, 9)

    # Embedding table: [pad(zeros); unk ~ U(-0.05, 0.05); word2vec-like weights]
    pad_row = jnp.zeros((1, E), jnp.float32)
    unk_row = jax.random.uniform(k_unk, (1, E), jnp.float32, -0.05, 0.05)
    w2v_rows = jax.random.normal(k_emb, (VOCAB, E), jnp.float32) * 0.1
    emb_table = jnp.concatenate([pad_row, unk_row, w2v_rows], axis=0)  # (VOCAB+2, E)

    # LSTM + Linear parameters (PyTorch shapes), deterministic init
    s = 1.0 / float(H) ** 0.5
    w_ih = jax.random.uniform(k_ih, (4 * H, E), jnp.float32, -s, s)
    w_hh = jax.random.uniform(k_hh, (4 * H, H), jnp.float32, -s, s)
    b_ih = jax.random.uniform(k_bih, (4 * H,), jnp.float32, -s, s)
    b_hh = jax.random.uniform(k_bhh, (4 * H,), jnp.float32, -s, s)
    w_out = jax.random.uniform(k_wo, (C, H), jnp.float32, -s, s)
    b_out = jax.random.uniform(k_bo, (C,), jnp.float32, -s, s)

    # Integer token ids (0 = padding)
    sentence = jax.random.randint(k_tok, (B, T), 0, VOCAB + 2)

    tag_scores = lstm_classifier_forward(sentence, emb_table, w_ih, w_hh,
                                         b_ih, b_hh, w_out, b_out)
    jax.block_until_ready(tag_scores)
    assert tag_scores.shape == (B, C)
    assert bool(jnp.all(jnp.isfinite(tag_scores)))
    print("KERNEL_OK")
</pallas_src>

<mosaic_0001>
module attributes {stable_mosaic.version = 11 : i64} {
  func.func @lstm_classifier_kernel(%arg0: memref<64x32xbf16, #tpu.memory_space<vmem>>, %arg1: memref<32x512xbf16, #tpu.memory_space<vmem>>, %arg2: memref<128x512xbf16, #tpu.memory_space<vmem>>, %arg3: memref<1x512xf32, #tpu.memory_space<vmem>>, %arg4: memref<128x128xbf16, #tpu.memory_space<vmem>>, %arg5: memref<1x128xf32, #tpu.memory_space<vmem>>, %arg6: memref<8x128xf32, #tpu.memory_space<vmem>>, %arg7: memref<64x512xf32, #tpu.memory_space<vmem>>) attributes {dimension_semantics = [], scalar_prefetch = 0 : i64, scratch_operands = 1 : i64, tpu.core_type = #tpu.core_type<tc>} {
    %c0 = arith.constant 0 : index
    %c0_0 = arith.constant 0 : index
    %0 = vector.load %arg0[%c0, %c0_0] : memref<64x32xbf16, #tpu.memory_space<vmem>>, vector<64x32xbf16>
    %c0_1 = arith.constant 0 : index
    %c0_2 = arith.constant 0 : index
    %1 = vector.load %arg1[%c0_1, %c0_2] : memref<32x512xbf16, #tpu.memory_space<vmem>>, vector<32x512xbf16>
    %cst = arith.constant dense<0.000000e+00> : vector<64x512xf32>
    %2 = tpu.matmul %0, %1, %cst {dimension_numbers = #tpu.dot_dimension_numbers<[1], [0], [0], [1], [0, 0, 1, 1], [], []>} : vector<64x32xbf16>, vector<32x512xbf16>, vector<64x512xf32> -> vector<64x512xf32>
    %c0_3 = arith.constant 0 : index
    %c0_4 = arith.constant 0 : index
    %3 = vector.load %arg3[%c0_3, %c0_4] : memref<1x512xf32, #tpu.memory_space<vmem>>, vector<1x512xf32>
    %4 = vector.broadcast %3 : vector<1x512xf32> to vector<64x512xf32>
    %5 = arith.addf %2, %4 : vector<64x512xf32>
    %c0_5 = arith.constant 0 : index
    %c0_6 = arith.constant 0 : index
    %6 = vector.load %arg7[%c0_5, %c0_6] : memref<64x512xf32, #tpu.memory_space<vmem>>, vector<64x512xf32>
    tpu.vector_store %arg7[%c0_5, %c0_6], %5 {strides = array<i32>} : memref<64x512xf32, #tpu.memory_space<vmem>>, vector<64x512xf32>,
    %cst_7 = arith.constant 0.000000e+00 : f32
    %7 = vector.broadcast %cst_7 : f32 to vector<8x128xf32>
    %cst_8 = arith.constant 0.000000e+00 : f32
    %8 = vector.broadcast %cst_8 : f32 to vector<8x128xf32>
    %c0_i32 = arith.constant 0 : i32
    %c8_i32 = arith.constant 8 : i32
    %9 = arith.muli %c0_i32, %c8_i32 : i32
    %10 = tpu.assume_multiple %9, 8 : i32
    %11 = arith.index_cast %10 : i32 to index
    %c0_9 = arith.constant 0 : index
    %12 = vector.load %arg7[%11, %c0_9] : memref<64x512xf32, #tpu.memory_space<vmem>>, vector<8x512xf32>
    %13 = arith.truncf %7 : vector<8x128xf32> to vector<8x128xbf16>
    %c0_10 = arith.constant 0 : index
    %c0_11 = arith.constant 0 : index
    %14 = vector.load %arg2[%c0_10, %c0_11] : memref<128x512xbf16, #tpu.memory_space<vmem>>, vector<128x512xbf16>
    %cst_12 = arith.constant dense<0.000000e+00> : vector<8x512xf32>
    %15 = tpu.matmul %13, %14, %cst_12 {dimension_numbers = #tpu.dot_dimension_numbers<[1], [0], [0], [1], [0, 0, 1, 1], [], []>} : vector<8x128xbf16>, vector<128x512xbf16>, vector<8x512xf32> -> vector<8x512xf32>
    %16 = arith.addf %12, %15 : vector<8x512xf32>
    %17 = vector.extract_strided_slice %16 {offsets = [0, 0], sizes = [8, 128], strides = [1, 1]} : vector<8x512xf32> to vector<8x128xf32>
    %18 = arith.negf %17 : vector<8x128xf32>
    %19 = math.exp %18 : vector<8x128xf32>
    %cst_13 = arith.constant 1.000000e+00 : f32
    %20 = vector.broadcast %cst_13 : f32 to vector<8x128xf32>
    %21 = arith.addf %20, %19 : vector<8x128xf32>
    %22 = arith.divf %20, %21 : vector<8x128xf32>
    %23 = vector.extract_strided_slice %16 {offsets = [0, 128], sizes = [8, 128], strides = [1, 1]} : vector<8x512xf32> to vector<8x128xf32>
    %24 = arith.negf %23 : vector<8x128xf32>
    %25 = math.exp %24 : vector<8x128xf32>
    %cst_14 = arith.constant 1.000000e+00 : f32
    %26 = vector.broadcast %cst_14 : f32 to vector<8x128xf32>
    %27 = arith.addf %26, %25 : vector<8x128xf32>
    %28 = arith.divf %26, %27 : vector<8x128xf32>
    %29 = vector.extract_strided_slice %16 {offsets = [0, 256], sizes = [8, 128], strides = [1, 1]} : vector<8x512xf32> to vector<8x128xf32>
    %30 = math.tanh %29 : vector<8x128xf32>
    %31 = vector.extract_strided_slice %16 {offsets = [0, 384], sizes = [8, 128], strides = [1, 1]} : vector<8x512xf32> to vector<8x128xf32>
    %32 = arith.negf %31 : vector<8x128xf32>
    %33 = math.exp %32 : vector<8x128xf32>
    %cst_15 = arith.constant 1.000000e+00 : f32
    %34 = vector.broadcast %cst_15 : f32 to vector<8x128xf32>
    %35 = arith.addf %34, %33 : vector<8x128xf32>
    %36 = arith.divf %34, %35 : vector<8x128xf32>
    %37 = arith.mulf %28, %8 : vector<8x128xf32>
    %38 = arith.mulf %22, %30 : vector<8x128xf32>
    %39 = arith.addf %37, %38 : vector<8x128xf32>
    %40 = math.tanh %39 : vector<8x128xf32>
    %41 = arith.mulf %36, %40 : vector<8x128xf32>
    %c1_i32 = arith.constant 1 : i32
    %c8_i32_16 = arith.constant 8 : i32
    %42 = arith.muli %c1_i32, %c8_i32_16 : i32
    %43 = tpu.assume_multiple %42, 8 : i32
    %44 = arith.index_cast %43 : i32 to index
    %c0_17 = arith.constant 0 : index
    %45 = vector.load %arg7[%44, %c0_17] : memref<64x512xf32, #tpu.memory_space<vmem>>, vector<8x512xf32>
    %46 = arith.truncf %41 : vector<8x128xf32> to vector<8x128xbf16>
    %c0_18 = arith.constant 0 : index
    %c0_19 = arith.constant 0 : index
    %47 = vector.load %arg2[%c0_18, %c0_19] : memref<128x512xbf16, #tpu.memory_space<vmem>>, vector<128x512xbf16>
    %cst_20 = arith.constant dense<0.000000e+00> : vector<8x512xf32>
    %48 = tpu.matmul %46, %47, %cst_20 {dimension_numbers = #tpu.dot_dimension_numbers<[1], [0], [0], [1], [0, 0, 1, 1], [], []>} : vector<8x128xbf16>, vector<128x512xbf16>, vector<8x512xf32> -> vector<8x512xf32>
    %49 = arith.addf %45, %48 : vector<8x512xf32>
    %50 = vector.extract_strided_slice %49 {offsets = [0, 0], sizes = [8, 128], strides = [1, 1]} : vector<8x512xf32> to vector<8x128xf32>
    %51 = arith.negf %50 : vector<8x128xf32>
    %52 = math.exp %51 : vector<8x128xf32>
    %cst_21 = arith.constant 1.000000e+00 : f32
    %53 = vector.broadcast %cst_21 : f32 to vector<8x128xf32>
    %54 = arith.addf %53, %52 : vector<8x128xf32>
    %55 = arith.divf %53, %54 : vector<8x128xf32>
    %56 = vector.extract_strided_slice %49 {offsets = [0, 128], sizes = [8, 128], strides = [1, 1]} : vector<8x512xf32> to vector<8x128xf32>
    %57 = arith.negf %56 : vector<8x128xf32>
    %58 = math.exp %57 : vector<8x128xf32>
    %cst_22 = arith.constant 1.000000e+00 : f32
    %59 = vector.broadcast %cst_22 : f32 to vector<8x128xf32>
    %60 = arith.addf %59, %58 : vector<8x128xf32>
    %61 = arith.divf %59, %60 : vector<8x128xf32>
    %62 = vector.extract_strided_slice %49 {offsets = [0, 256], sizes = [8, 128], strides = [1, 1]} : vector<8x512xf32> to vector<8x128xf32>
    %63 = math.tanh %62 : vector<8x128xf32>
    %64 = vector.extract_strided_slice %49 {offsets = [0, 384], sizes = [8, 128], strides = [1, 1]} : vector<8x512xf32> to vector<8x128xf32>
    %65 = arith.negf %64 : vector<8x128xf32>
    %66 = math.exp %65 : vector<8x128xf32>
    %cst_23 = arith.constant 1.000000e+00 : f32
    %67 = vector.broadcast %cst_23 : f32 to vector<8x128xf32>
    %68 = arith.addf %67, %66 : vector<8x128xf32>
    %69 = arith.divf %67, %68 : vector<8x128xf32>
    %70 = arith.mulf %61, %39 : vector<8x128xf32>
    %71 = arith.mulf %55, %63 : vector<8x128xf32>
    %72 = arith.addf %70, %71 : vector<8x128xf32>
    %73 = math.tanh %72 : vector<8x128xf32>
    %74 = arith.mulf %69, %73 : vector<8x128xf32>
    %c2_i32 = arith.constant 2 : i32
    %c8_i32_24 = arith.constant 8 : i32
    %75 = arith.muli %c2_i32, %c8_i32_24 : i32
    %76 = tpu.assume_multiple %75, 8 : i32
    %77 = arith.index_cast %76 : i32 to index
    %c0_25 = arith.constant 0 : index
    %78 = vector.load %arg7[%77, %c0_25] : memref<64x512xf32, #tpu.memory_space<vmem>>, vector<8x512xf32>
    %79 = arith.truncf %74 : vector<8x128xf32> to vector<8x128xbf16>
    %c0_26 = arith.constant 0 : index
    %c0_27 = arith.constant 0 : index
    %80 = vector.load %arg2[%c0_26, %c0_27] : memref<128x512xbf16, #tpu.memory_space<vmem>>, vector<128x512xbf16>
    %cst_28 = arith.constant dense<0.000000e+00> : vector<8x512xf32>
    %81 = tpu.matmul %79, %80, %cst_28 {dimension_numbers = #tpu.dot_dimension_numbers<[1], [0], [0], [1], [0, 0, 1, 1], [], []>} : vector<8x128xbf16>, vector<128x512xbf16>, vector<8x512xf32> -> vector<8x512xf32>
    %82 = arith.addf %78, %81 : vector<8x512xf32>
    %83 = vector.extract_strided_slice %82 {offsets = [0, 0], sizes = [8, 128], strides = [1, 1]} : vector<8x512xf32> to vector<8x128xf32>
    %84 = arith.negf %83 : vector<8x128xf32>
    %85 = math.exp %84 : vector<8x128xf32>
    %cst_29 = arith.constant 1.000000e+00 : f32
    %86 = vector.broadcast %cst_29 : f32 to vector<8x128xf32>
    %87 = arith.addf %86, %85 : vector<8x128xf32>
    %88 = arith.divf %86, %87 : vector<8x128xf32>
    %89 = vector.extract_strided_slice %82 {offsets = [0, 128], sizes = [8, 128], strides = [1, 1]} : vector<8x512xf32> to vector<8x128xf32>
    %90 = arith.negf %89 : vector<8x128xf32>
    %91 = math.exp %90 : vector<8x128xf32>
    %cst_30 = arith.constant 1.000000e+00 : f32
    %92 = vector.broadcast %cst_30 : f32 to vector<8x128xf32>
    %93 = arith.addf %92, %91 : vector<8x128xf32>
    %94 = arith.divf %92, %93 : vector<8x128xf32>
    %95 = vector.extract_strided_slice %82 {offsets = [0, 256], sizes = [8, 128], strides = [1, 1]} : vector<8x512xf32> to vector<8x128xf32>
    %96 = math.tanh %95 : vector<8x128xf32>
    %97 = vector.extract_strided_slice %82 {offsets = [0, 384], sizes = [8, 128], strides = [1, 1]} : vector<8x512xf32> to vector<8x128xf32>
    %98 = arith.negf %97 : vector<8x128xf32>
    %99 = math.exp %98 : vector<8x128xf32>
    %cst_31 = arith.constant 1.000000e+00 : f32
    %100 = vector.broadcast %cst_31 : f32 to vector<8x128xf32>
    %101 = arith.addf %100, %99 : vector<8x128xf32>
    %102 = arith.divf %100, %101 : vector<8x128xf32>
    %103 = arith.mulf %94, %72 : vector<8x128xf32>
    %104 = arith.mulf %88, %96 : vector<8x128xf32>
    %105 = arith.addf %103, %104 : vector<8x128xf32>
    %106 = math.tanh %105 : vector<8x128xf32>
    %107 = arith.mulf %102, %106 : vector<8x128xf32>
    %c3_i32 = arith.constant 3 : i32
    %c8_i32_32 = arith.constant 8 : i32
    %108 = arith.muli %c3_i32, %c8_i32_32 : i32
    %109 = tpu.assume_multiple %108, 8 : i32
    %110 = arith.index_cast %109 : i32 to index
    %c0_33 = arith.constant 0 : index
    %111 = vector.load %arg7[%110, %c0_33] : memref<64x512xf32, #tpu.memory_space<vmem>>, vector<8x512xf32>
    %112 = arith.truncf %107 : vector<8x128xf32> to vector<8x128xbf16>
    %c0_34 = arith.constant 0 : index
    %c0_35 = arith.constant 0 : index
    %113 = vector.load %arg2[%c0_34, %c0_35] : memref<128x512xbf16, #tpu.memory_space<vmem>>, vector<128x512xbf16>
    %cst_36 = arith.constant dense<0.000000e+00> : vector<8x512xf32>
    %114 = tpu.matmul %112, %113, %cst_36 {dimension_numbers = #tpu.dot_dimension_numbers<[1], [0], [0], [1], [0, 0, 1, 1], [], []>} : vector<8x128xbf16>, vector<128x512xbf16>, vector<8x512xf32> -> vector<8x512xf32>
    %115 = arith.addf %111, %114 : vector<8x512xf32>
    %116 = vector.extract_strided_slice %115 {offsets = [0, 0], sizes = [8, 128], strides = [1, 1]} : vector<8x512xf32> to vector<8x128xf32>
    %117 = arith.negf %116 : vector<8x128xf32>
    %118 = math.exp %117 : vector<8x128xf32>
    %cst_37 = arith.constant 1.000000e+00 : f32
    %119 = vector.broadcast %cst_37 : f32 to vector<8x128xf32>
    %120 = arith.addf %119, %118 : vector<8x128xf32>
    %121 = arith.divf %119, %120 : vector<8x128xf32>
    %122 = vector.extract_strided_slice %115 {offsets = [0, 128], sizes = [8, 128], strides = [1, 1]} : vector<8x512xf32> to vector<8x128xf32>
    %123 = arith.negf %122 : vector<8x128xf32>
    %124 = math.exp %123 : vector<8x128xf32>
    %cst_38 = arith.constant 1.000000e+00 : f32
    %125 = vector.broadcast %cst_38 : f32 to vector<8x128xf32>
    %126 = arith.addf %125, %124 : vector<8x128xf32>
    %127 = arith.divf %125, %126 : vector<8x128xf32>
    %128 = vector.extract_strided_slice %115 {offsets = [0, 256], sizes = [8, 128], strides = [1, 1]} : vector<8x512xf32> to vector<8x128xf32>
    %129 = math.tanh %128 : vector<8x128xf32>
    %130 = vector.extract_strided_slice %115 {offsets = [0, 384], sizes = [8, 128], strides = [1, 1]} : vector<8x512xf32> to vector<8x128xf32>
    %131 = arith.negf %130 : vector<8x128xf32>
    %132 = math.exp %131 : vector<8x128xf32>
    %cst_39 = arith.constant 1.000000e+00 : f32
    %133 = vector.broadcast %cst_39 : f32 to vector<8x128xf32>
    %134 = arith.addf %133, %132 : vector<8x128xf32>
    %135 = arith.divf %133, %134 : vector<8x128xf32>
    %136 = arith.mulf %127, %105 : vector<8x128xf32>
    %137 = arith.mulf %121, %129 : vector<8x128xf32>
    %138 = arith.addf %136, %137 : vector<8x128xf32>
    %139 = math.tanh %138 : vector<8x128xf32>
    %140 = arith.mulf %135, %139 : vector<8x128xf32>
    %c4_i32 = arith.constant 4 : i32
    %c8_i32_40 = arith.constant 8 : i32
    %141 = arith.muli %c4_i32, %c8_i32_40 : i32
    %142 = tpu.assume_multiple %141, 8 : i32
    %143 = arith.index_cast %142 : i32 to index
    %c0_41 = arith.constant 0 : index
    %144 = vector.load %arg7[%143, %c0_41] : memref<64x512xf32, #tpu.memory_space<vmem>>, vector<8x512xf32>
    %145 = arith.truncf %140 : vector<8x128xf32> to vector<8x128xbf16>
    %c0_42 = arith.constant 0 : index
    %c0_43 = arith.constant 0 : index
    %146 = vector.load %arg2[%c0_42, %c0_43] : memref<128x512xbf16, #tpu.memory_space<vmem>>, vector<128x512xbf16>
    %cst_44 = arith.constant dense<0.000000e+00> : vector<8x512xf32>
    %147 = tpu.matmul %145, %146, %cst_44 {dimension_numbers = #tpu.dot_dimension_numbers<[1], [0], [0], [1], [0, 0, 1, 1], [], []>} : vector<8x128xbf16>, vector<128x512xbf16>, vector<8x512xf32> -> vector<8x512xf32>
    %148 = arith.addf %144, %147 : vector<8x512xf32>
    %149 = vector.extract_strided_slice %148 {offsets = [0, 0], sizes = [8, 128], strides = [1, 1]} : vector<8x512xf32> to vector<8x128xf32>
    %150 = arith.negf %149 : vector<8x128xf32>
    %151 = math.exp %150 : vector<8x128xf32>
    %cst_45 = arith.constant 1.000000e+00 : f32
    %152 = vector.broadcast %cst_45 : f32 to vector<8x128xf32>
    %153 = arith.addf %152, %151 : vector<8x128xf32>
    %154 = arith.divf %152, %153 : vector<8x128xf32>
    %155 = vector.extract_strided_slice %148 {offsets = [0, 128], sizes = [8, 128], strides = [1, 1]} : vector<8x512xf32> to vector<8x128xf32>
    %156 = arith.negf %155 : vector<8x128xf32>
    %157 = math.exp %156 : vector<8x128xf32>
    %cst_46 = arith.constant 1.000000e+00 : f32
    %158 = vector.broadcast %cst_46 : f32 to vector<8x128xf32>
    %159 = arith.addf %158, %157 : vector<8x128xf32>
    %160 = arith.divf %158, %159 : vector<8x128xf32>
    %161 = vector.extract_strided_slice %148 {offsets = [0, 256], sizes = [8, 128], strides = [1, 1]} : vector<8x512xf32> to vector<8x128xf32>
    %162 = math.tanh %161 : vector<8x128xf32>
    %163 = vector.extract_strided_slice %148 {offsets = [0, 384], sizes = [8, 128], strides = [1, 1]} : vector<8x512xf32> to vector<8x128xf32>
    %164 = arith.negf %163 : vector<8x128xf32>
    %165 = math.exp %164 : vector<8x128xf32>
    %cst_47 = arith.constant 1.000000e+00 : f32
    %166 = vector.broadcast %cst_47 : f32 to vector<8x128xf32>
    %167 = arith.addf %166, %165 : vector<8x128xf32>
    %168 = arith.divf %166, %167 : vector<8x128xf32>
    %169 = arith.mulf %160, %138 : vector<8x128xf32>
    %170 = arith.mulf %154, %162 : vector<8x128xf32>
    %171 = arith.addf %169, %170 : vector<8x128xf32>
    %172 = math.tanh %171 : vector<8x128xf32>
    %173 = arith.mulf %168, %172 : vector<8x128xf32>
    %c5_i32 = arith.constant 5 : i32
    %c8_i32_48 = arith.constant 8 : i32
    %174 = arith.muli %c5_i32, %c8_i32_48 : i32
    %175 = tpu.assume_multiple %174, 8 : i32
    %176 = arith.index_cast %175 : i32 to index
    %c0_49 = arith.constant 0 : index
    %177 = vector.load %arg7[%176, %c0_49] : memref<64x512xf32, #tpu.memory_space<vmem>>, vector<8x512xf32>
    %178 = arith.truncf %173 : vector<8x128xf32> to vector<8x128xbf16>
    %c0_50 = arith.constant 0 : index
    %c0_51 = arith.constant 0 : index
    %179 = vector.load %arg2[%c0_50, %c0_51] : memref<128x512xbf16, #tpu.memory_space<vmem>>, vector<128x512xbf16>
    %cst_52 = arith.constant dense<0.000000e+00> : vector<8x512xf32>
    %180 = tpu.matmul %178, %179, %cst_52 {dimension_numbers = #tpu.dot_dimension_numbers<[1], [0], [0], [1], [0, 0, 1, 1], [], []>} : vector<8x128xbf16>, vector<128x512xbf16>, vector<8x512xf32> -> vector<8x512xf32>
    %181 = arith.addf %177, %180 : vector<8x512xf32>
    %182 = vector.extract_strided_slice %181 {offsets = [0, 0], sizes = [8, 128], strides = [1, 1]} : vector<8x512xf32> to vector<8x128xf32>
    %183 = arith.negf %182 : vector<8x128xf32>
    %184 = math.exp %183 : vector<8x128xf32>
    %cst_53 = arith.constant 1.000000e+00 : f32
    %185 = vector.broadcast %cst_53 : f32 to vector<8x128xf32>
    %186 = arith.addf %185, %184 : vector<8x128xf32>
    %187 = arith.divf %185, %186 : vector<8x128xf32>
    %188 = vector.extract_strided_slice %181 {offsets = [0, 128], sizes = [8, 128], strides = [1, 1]} : vector<8x512xf32> to vector<8x128xf32>
    %189 = arith.negf %188 : vector<8x128xf32>
    %190 = math.exp %189 : vector<8x128xf32>
    %cst_54 = arith.constant 1.000000e+00 : f32
    %191 = vector.broadcast %cst_54 : f32 to vector<8x128xf32>
    %192 = arith.addf %191, %190 : vector<8x128xf32>
    %193 = arith.divf %191, %192 : vector<8x128xf32>
    %194 = vector.extract_strided_slice %181 {offsets = [0, 256], sizes = [8, 128], strides = [1, 1]} : vector<8x512xf32> to vector<8x128xf32>
    %195 = math.tanh %194 : vector<8x128xf32>
    %196 = vector.extract_strided_slice %181 {offsets = [0, 384], sizes = [8, 128], strides = [1, 1]} : vector<8x512xf32> to vector<8x128xf32>
    %197 = arith.negf %196 : vector<8x128xf32>
    %198 = math.exp %197 : vector<8x128xf32>
    %cst_55 = arith.constant 1.000000e+00 : f32
    %199 = vector.broadcast %cst_55 : f32 to vector<8x128xf32>
    %200 = arith.addf %199, %198 : vector<8x128xf32>
    %201 = arith.divf %199, %200 : vector<8x128xf32>
    %202 = arith.mulf %193, %171 : vector<8x128xf32>
    %203 = arith.mulf %187, %195 : vector<8x128xf32>
    %204 = arith.addf %202, %203 : vector<8x128xf32>
    %205 = math.tanh %204 : vector<8x128xf32>
    %206 = arith.mulf %201, %205 : vector<8x128xf32>
    %c6_i32 = arith.constant 6 : i32
    %c8_i32_56 = arith.constant 8 : i32
    %207 = arith.muli %c6_i32, %c8_i32_56 : i32
    %208 = tpu.assume_multiple %207, 8 : i32
    %209 = arith.index_cast %208 : i32 to index
    %c0_57 = arith.constant 0 : index
    %210 = vector.load %arg7[%209, %c0_57] : memref<64x512xf32, #tpu.memory_space<vmem>>, vector<8x512xf32>
    %211 = arith.truncf %206 : vector<8x128xf32> to vector<8x128xbf16>
    %c0_58 = arith.constant 0 : index
    %c0_59 = arith.constant 0 : index
    %212 = vector.load %arg2[%c0_58, %c0_59] : memref<128x512xbf16, #tpu.memory_space<vmem>>, vector<128x512xbf16>
    %cst_60 = arith.constant dense<0.000000e+00> : vector<8x512xf32>
    %213 = tpu.matmul %211, %212, %cst_60 {dimension_numbers = #tpu.dot_dimension_numbers<[1], [0], [0], [1], [0, 0, 1, 1], [], []>} : vector<8x128xbf16>, vector<128x512xbf16>, vector<8x512xf32> -> vector<8x512xf32>
    %214 = arith.addf %210, %213 : vector<8x512xf32>
    %215 = vector.extract_strided_slice %214 {offsets = [0, 0], sizes = [8, 128], strides = [1, 1]} : vector<8x512xf32> to vector<8x128xf32>
    %216 = arith.negf %215 : vector<8x128xf32>
    %217 = math.exp %216 : vector<8x128xf32>
    %cst_61 = arith.constant 1.000000e+00 : f32
    %218 = vector.broadcast %cst_61 : f32 to vector<8x128xf32>
    %219 = arith.addf %218, %217 : vector<8x128xf32>
    %220 = arith.divf %218, %219 : vector<8x128xf32>
    %221 = vector.extract_strided_slice %214 {offsets = [0, 128], sizes = [8, 128], strides = [1, 1]} : vector<8x512xf32> to vector<8x128xf32>
    %222 = arith.negf %221 : vector<8x128xf32>
    %223 = math.exp %222 : vector<8x128xf32>
    %cst_62 = arith.constant 1.000000e+00 : f32
    %224 = vector.broadcast %cst_62 : f32 to vector<8x128xf32>
    %225 = arith.addf %224, %223 : vector<8x128xf32>
    %226 = arith.divf %224, %225 : vector<8x128xf32>
    %227 = vector.extract_strided_slice %214 {offsets = [0, 256], sizes = [8, 128], strides = [1, 1]} : vector<8x512xf32> to vector<8x128xf32>
    %228 = math.tanh %227 : vector<8x128xf32>
    %229 = vector.extract_strided_slice %214 {offsets = [0, 384], sizes = [8, 128], strides = [1, 1]} : vector<8x512xf32> to vector<8x128xf32>
    %230 = arith.negf %229 : vector<8x128xf32>
    %231 = math.exp %230 : vector<8x128xf32>
    %cst_63 = arith.constant 1.000000e+00 : f32
    %232 = vector.broadcast %cst_63 : f32 to vector<8x128xf32>
    %233 = arith.addf %232, %231 : vector<8x128xf32>
    %234 = arith.divf %232, %233 : vector<8x128xf32>
    %235 = arith.mulf %226, %204 : vector<8x128xf32>
    %236 = arith.mulf %220, %228 : vector<8x128xf32>
    %237 = arith.addf %235, %236 : vector<8x128xf32>
    %238 = math.tanh %237 : vector<8x128xf32>
    %239 = arith.mulf %234, %238 : vector<8x128xf32>
    %c7_i32 = arith.constant 7 : i32
    %c8_i32_64 = arith.constant 8 : i32
    %240 = arith.muli %c7_i32, %c8_i32_64 : i32
    %241 = tpu.assume_multiple %240, 8 : i32
    %242 = arith.index_cast %241 : i32 to index
    %c0_65 = arith.constant 0 : index
    %243 = vector.load %arg7[%242, %c0_65] : memref<64x512xf32, #tpu.memory_space<vmem>>, vector<8x512xf32>
    %244 = arith.truncf %239 : vector<8x128xf32> to vector<8x128xbf16>
    %c0_66 = arith.constant 0 : index
    %c0_67 = arith.constant 0 : index
    %245 = vector.load %arg2[%c0_66, %c0_67] : memref<128x512xbf16, #tpu.memory_space<vmem>>, vector<128x512xbf16>
    %cst_68 = arith.constant dense<0.000000e+00> : vector<8x512xf32>
    %246 = tpu.matmul %244, %245, %cst_68 {dimension_numbers = #tpu.dot_dimension_numbers<[1], [0], [0], [1], [0, 0, 1, 1], [], []>} : vector<8x128xbf16>, vector<128x512xbf16>, vector<8x512xf32> -> vector<8x512xf32>
    %247 = arith.addf %243, %246 : vector<8x512xf32>
    %248 = vector.extract_strided_slice %247 {offsets = [0, 0], sizes = [8, 128], strides = [1, 1]} : vector<8x512xf32> to vector<8x128xf32>
    %249 = arith.negf %248 : vector<8x128xf32>
    %250 = math.exp %249 : vector<8x128xf32>
    %cst_69 = arith.constant 1.000000e+00 : f32
    %251 = vector.broadcast %cst_69 : f32 to vector<8x128xf32>
    %252 = arith.addf %251, %250 : vector<8x128xf32>
    %253 = arith.divf %251, %252 : vector<8x128xf32>
    %254 = vector.extract_strided_slice %247 {offsets = [0, 128], sizes = [8, 128], strides = [1, 1]} : vector<8x512xf32> to vector<8x128xf32>
    %255 = arith.negf %254 : vector<8x128xf32>
    %256 = math.exp %255 : vector<8x128xf32>
    %cst_70 = arith.constant 1.000000e+00 : f32
    %257 = vector.broadcast %cst_70 : f32 to vector<8x128xf32>
    %258 = arith.addf %257, %256 : vector<8x128xf32>
    %259 = arith.divf %257, %258 : vector<8x128xf32>
    %260 = vector.extract_strided_slice %247 {offsets = [0, 256], sizes = [8, 128], strides = [1, 1]} : vector<8x512xf32> to vector<8x128xf32>
    %261 = math.tanh %260 : vector<8x128xf32>
    %262 = vector.extract_strided_slice %247 {offsets = [0, 384], sizes = [8, 128], strides = [1, 1]} : vector<8x512xf32> to vector<8x128xf32>
    %263 = arith.negf %262 : vector<8x128xf32>
    %264 = math.exp %263 : vector<8x128xf32>
    %cst_71 = arith.constant 1.000000e+00 : f32
    %265 = vector.broadcast %cst_71 : f32 to vector<8x128xf32>
    %266 = arith.addf %265, %264 : vector<8x128xf32>
    %267 = arith.divf %265, %266 : vector<8x128xf32>
    %268 = arith.mulf %259, %237 : vector<8x128xf32>
    %269 = arith.mulf %253, %261 : vector<8x128xf32>
    %270 = arith.addf %268, %269 : vector<8x128xf32>
    %271 = math.tanh %270 : vector<8x128xf32>
    %272 = arith.mulf %267, %271 : vector<8x128xf32>
    %c8_i32_72 = arith.constant 8 : i32
    %273 = arith.truncf %272 : vector<8x128xf32> to vector<8x128xbf16>
    %c0_73 = arith.constant 0 : index
    %c0_74 = arith.constant 0 : index
    %274 = vector.load %arg4[%c0_73, %c0_74] : memref<128x128xbf16, #tpu.memory_space<vmem>>, vector<128x128xbf16>
    %cst_75 = arith.constant dense<0.000000e+00> : vector<8x128xf32>
    %275 = tpu.matmul %273, %274, %cst_75 {dimension_numbers = #tpu.dot_dimension_numbers<[1], [0], [0], [1], [0, 0, 1, 1], [], []>} : vector<8x128xbf16>, vector<128x128xbf16>, vector<8x128xf32> -> vector<8x128xf32>
    %c0_76 = arith.constant 0 : index
    %c0_77 = arith.constant 0 : index
    %276 = vector.load %arg5[%c0_76, %c0_77] : memref<1x128xf32, #tpu.memory_space<vmem>>, vector<1x128xf32>
    %277 = vector.broadcast %276 : vector<1x128xf32> to vector<8x128xf32>
    %278 = arith.addf %275, %277 : vector<8x128xf32>
    %cst_78 = arith.constant dense<0xFF800000> : vector<8xf32>
    %279 = vector.multi_reduction <maximumf>, %278, %cst_78 [1] : vector<8x128xf32> to vector<8xf32>
    %280 = vector.shape_cast %279 : vector<8xf32> to vector<8x1xf32>
    %281 = vector.broadcast %280 : vector<8x1xf32> to vector<8x128xf32>
    %282 = arith.subf %278, %281 : vector<8x128xf32>
    %283 = math.exp %282 : vector<8x128xf32>
    %cst_79 = arith.constant dense<0.000000e+00> : vector<8xf32>
    %284 = vector.multi_reduction <add>, %283, %cst_79 [1] : vector<8x128xf32> to vector<8xf32>
    %285 = vector.shape_cast %284 : vector<8xf32> to vector<8x1xf32>
    %286 = math.log %285 : vector<8x1xf32>
    %287 = vector.broadcast %286 : vector<8x1xf32> to vector<8x128xf32>
    %288 = arith.subf %282, %287 : vector<8x128xf32>
    %c0_80 = arith.constant 0 : index
    %c0_81 = arith.constant 0 : index
    %289 = vector.load %arg6[%c0_80, %c0_81] : memref<8x128xf32, #tpu.memory_space<vmem>>, vector<8x128xf32>
    tpu.vector_store %arg6[%c0_80, %c0_81], %288 {strides = array<i32>} : memref<8x128xf32, #tpu.memory_space<vmem>>, vector<8x128xf32>,
    return
  }
}

</mosaic_0001>

<llo_original>
// kernel: tpu_custom_call.1
$region0: #{tpu_custom_call.1}
  #allocation0 [shape = 'u32[]', space=smem, size = 0x4, offset = 0x4, fixed_abs, tag = 'smem constant byte address 0x4 - core index']
  #allocation1 [shape = 'u32[144,128]{1,0:T(1,128)}', space=vmem, size = 0x12000, scoped, tag = 'internal scratch']
  #allocation2 [shape = 'f32[64,512]{1,0:T(8,128)}', space=vmem, size = 0x20000, scoped, tag = 'scratch operand']
  %s0 = inlined_call_operand.vmem [shape: bf16[64,32], index: 0, kind: input, shape index: {}]
  %s1 = inlined_call_operand.hbm [shape: bf16[32,512], index: 1, kind: input, shape index: {}]
  %s2 = inlined_call_operand.hbm [shape: bf16[128,512], index: 2, kind: input, shape index: {}]
  %s3 = inlined_call_operand.vmem [shape: f32[1,512], index: 3, kind: input, shape index: {}]
  %s4 = inlined_call_operand.hbm [shape: bf16[128,128], index: 4, kind: input, shape index: {}]
  %s5 = inlined_call_operand.vmem [shape: f32[1,128], index: 5, kind: input, shape index: {}]
  %s6 = inlined_call_operand.hbm [shape: f32[8,128], index: 6, kind: output, shape index: {}]
  %s7 = sld [smem:[#allocation0]]
  $region46: #{tpu_custom_call.1} parent=0
    _
  %s9 = ssub.s32 1, %s7
  %s10 = scalar_select 0, %s9, %s7
  $region1: #{tpu_custom_call.1} parent=0
    #allocation3 [shape = 'u8[32768]{0}', space=vmem, size = 0x8000, scoped, tag = 'input window, operand 1, single buffered']
    #allocation4 [shape = 's32[1]{0}', space=sflag, size = 0x4, scoped, tag = 'scoped memory for tpu_custom_call.1']
    #allocation5 [shape = 's32[1]{0}', space=sflag, size = 0x4, scoped, tag = 'scoped memory for tpu_custom_call.1']
    #allocation6 [shape = 'u8[131072]{0}', space=vmem, size = 0x20000, scoped, tag = 'input window, operand 2, single buffered']
    #allocation7 [shape = 's32[1]{0}', space=sflag, size = 0x4, scoped, tag = 'scoped memory for tpu_custom_call.1']
    #allocation8 [shape = 'u8[32768]{0}', space=vmem, size = 0x8000, scoped, tag = 'input window, operand 4, single buffered']
    #allocation9 [shape = 'u8[4096]{0}', space=vmem, size = 0x1000, scoped, tag = 'output window, operand 0, single buffered']
    %11 = vsyncpa [#allocation4], 0
    %12 = vsyncpa [#allocation7], 0
    %13 = vsyncpa [#allocation5], 0
    // Predicated region
    $region2: #{tpu_custom_call.1} parent=1 // pred_check
      _
    $region3: #{tpu_custom_call.1} parent=1 // pred_check_branch
      %15 = sbr.rel (0) target = $region5
    $region4: #{tpu_custom_call.1} parent=1 // pred_region
      _
    $region5: #{tpu_custom_call.1} parent=1 // pred_fallthru
      _
    // Predicated region
    $region6: #{tpu_custom_call.1} parent=1 // pred_check
      _
    $region7: #{tpu_custom_call.1} parent=1 // pred_check_branch
      %17 = sbr.rel (0) target = $region9
    $region8: #{tpu_custom_call.1} parent=1 // pred_region
      %s19 = ssub.s32 1024, 1024
      %20 = vsyncadd [#allocation4], %s19
      %s21 = sshll.u32 [#allocation3], 4
      %s22 = int_to_ptr.vmem [resolvable:$true] %s21
      %27 = dma.hbm_to_vmem [thread:$0]  %s1, 1024, %s22, [#allocation4], 256, 256, 16
    $region9: #{tpu_custom_call.1} parent=1 // pred_fallthru
      _
    // Predicated region
    $region10: #{tpu_custom_call.1} parent=1 // pred_check
      _
    $region11: #{tpu_custom_call.1} parent=1 // pred_check_branch
      %29 = sbr.rel (0) target = $region13
    $region12: #{tpu_custom_call.1} parent=1 // pred_region
      %s31 = ssub.s32 4096, 4096
      %32 = vsyncadd [#allocation7], %s31
      %s33 = sshll.u32 [#allocation6], 4
      %s34 = int_to_ptr.vmem [resolvable:$true] %s33
      %39 = dma.hbm_to_vmem [thread:$0]  %s2, 4096, %s34, [#allocation7], 256, 256, 16
    $region13: #{tpu_custom_call.1} parent=1 // pred_fallthru
      _
    // Predicated region
    $region14: #{tpu_custom_call.1} parent=1 // pred_check
      _
    $region15: #{tpu_custom_call.1} parent=1 // pred_check_branch
      %41 = sbr.rel (0) target = $region17
    $region16: #{tpu_custom_call.1} parent=1 // pred_region
      _
    $region17: #{tpu_custom_call.1} parent=1 // pred_fallthru
      _
    // Predicated region
    $region18: #{tpu_custom_call.1} parent=1 // pred_check
      _
    $region19: #{tpu_custom_call.1} parent=1 // pred_check_branch
      %43 = sbr.rel (0) target = $region21
    $region20: #{tpu_custom_call.1} parent=1 // pred_region
      %s45 = ssub.s32 1024, 1024
      %46 = vsyncadd [#allocation7], %s45
      %s47 = sshll.u32 [#allocation8], 4
      %s48 = int_to_ptr.vmem [resolvable:$true] %s47
      %53 = dma.hbm_to_vmem [thread:$0]  %s4, 1024, %s48, [#allocation7], 64, 64, 4
    $region21: #{tpu_custom_call.1} parent=1 // pred_fallthru
      _
    // Predicated region
    $region22: #{tpu_custom_call.1} parent=1 // pred_check
      _
    $region23: #{tpu_custom_call.1} parent=1 // pred_check_branch
      %55 = sbr.rel (0) target = $region25
    $region24: #{tpu_custom_call.1} parent=1 // pred_region
      _
    $region25: #{tpu_custom_call.1} parent=1 // pred_fallthru
      _
    // Predicated region
    $region26: #{tpu_custom_call.1} parent=1 // pred_check
      _
    $region27: #{tpu_custom_call.1} parent=1 // pred_check_branch
      %57 = sbr.rel (0) target = $region29
    $region28: #{tpu_custom_call.1} parent=1 // pred_region
      %58 = dma.done [#allocation4], 1024
    $region29: #{tpu_custom_call.1} parent=1 // pred_fallthru
      _
    // Predicated region
    $region30: #{tpu_custom_call.1} parent=1 // pred_check
      _
    $region31: #{tpu_custom_call.1} parent=1 // pred_check_branch
      %60 = sbr.rel (0) target = $region33
    $region32: #{tpu_custom_call.1} parent=1 // pred_region
      %61 = dma.done [#allocation7], 4096
    $region33: #{tpu_custom_call.1} parent=1 // pred_fallthru
      _
    // Predicated region
    $region34: #{tpu_custom_call.1} parent=1 // pred_check
      _
    $region35: #{tpu_custom_call.1} parent=1 // pred_check_branch
      %63 = sbr.rel (0) target = $region37
    $region36: #{tpu_custom_call.1} parent=1 // pred_region
      %64 = dma.done [#allocation7], 1024
    $region37: #{tpu_custom_call.1} parent=1 // pred_fallthru
      _
    %v66 = vld [vmem:[%s0] sm:$0xf]
    %v67 = vld [vmem:[%s0 + $0x4] sm:$0xf]
    %v68 = vld [vmem:[%s0 + $0x8] sm:$0xf]
    %v69 = vld [vmem:[%s0 + $0xc] sm:$0xf]
    %v70 = vld [vmem:[%s0 + $0x10] sm:$0xf]
    %v71 = vld [vmem:[%s0 + $0x14] sm:$0xf]
    %v72 = vld [vmem:[%s0 + $0x18] sm:$0xf]
    %v73 = vld [vmem:[%s0 + $0x1c] sm:$0xf]
    %v74 = vld [vmem:[#allocation3] sm:$0xff]
    %v75 = vld [vmem:[#allocation3 + $0x8] sm:$0xff]
    %v76 = vld [vmem:[#allocation3 + $0x10] sm:$0xff]
    %v77 = vld [vmem:[#allocation3 + $0x18] sm:$0xff]
    %v78 = vld [vmem:[#allocation3 + $0x20] sm:$0xff]
    %v79 = vld [vmem:[#allocation3 + $0x28] sm:$0xff]
    %v80 = vld [vmem:[#allocation3 + $0x30] sm:$0xff]
    %v81 = vld [vmem:[#allocation3 + $0x38] sm:$0xff]
    %v82 = vld [vmem:[%s3] sm:$0xf]
    %v84 = vlaneseq
    %v85 = vshrl.u32 %v84, 7
    %v86 = vsub.s32 0, %v85
    %v87 = vrot.slane %v82, %v86
    %v88 = vlaneseq
    %v89 = vshrl.u32 %v88, 7
    %v90 = vsub.s32 1, %v89
    %v91 = vrot.slane %v82, %v90
    %v92 = vlaneseq
    %v93 = vshrl.u32 %v92, 7
    %v94 = vsub.s32 2, %v93
    %v95 = vrot.slane %v82, %v94
    %v96 = vlaneseq
    %v97 = vshrl.u32 %v96, 7
    %v98 = vsub.s32 3, %v97
    %v99 = vrot.slane %v82, %v98
    %v112 = vunpack.c.l.b16 %v66
    %v113 = vunpack.c.l.b16 %v67
    %v114 = vunpack.c.l.b16 %v68
    %v115 = vunpack.c.l.b16 %v69
    %v116 = vunpack.c.l.b16 %v70
    %v117 = vunpack.c.l.b16 %v71
    %v118 = vunpack.c.l.b16 %v72
    %v119 = vunpack.c.l.b16 %v73
    %v120 = vpack.c.b16 %v113, %v112
    %v121 = vpack.c.b16 %v115, %v114
    %v122 = vpack.c.b16 %v117, %v116
    %v123 = vpack.c.b16 %v119, %v118
    %v132 = vunpack.c.l.b16 %v74
    %v133 = vunpack.c.h.b16 %v74
    %v134 = vunpack.c.l.b16 %v75
    %v135 = vunpack.c.h.b16 %v75
    %v136 = vunpack.c.l.b16 %v76
    %v137 = vunpack.c.h.b16 %v76
    %v138 = vunpack.c.l.b16 %v77
    %v139 = vunpack.c.h.b16 %v77
    %v140 = vunpack.c.l.b16 %v78
    %v141 = vunpack.c.h.b16 %v78
    %v142 = vunpack.c.l.b16 %v79
    %v143 = vunpack.c.h.b16 %v79
    %v144 = vunpack.c.l.b16 %v80
    %v145 = vunpack.c.h.b16 %v80
    %v146 = vunpack.c.l.b16 %v81
    %v147 = vunpack.c.h.b16 %v81
    %v148 = vpack.c.b16 %v136, %v132
    %v149 = vpack.c.b16 %v137, %v133
    %v150 = vpack.c.b16 %v138, %v134
    %v151 = vpack.c.b16 %v139, %v135
    %v152 = vpack.c.b16 %v144, %v140
    %v153 = vpack.c.b16 %v145, %v141
    %v154 = vpack.c.b16 %v146, %v142
    %v155 = vpack.c.b16 %v147, %v143
    %vm164 = vcmask 261120
    %v166 = vsel %vm164, %v120, 0
    %v169 = vsel %vm164, %v121, 0
    %v172 = vsel %vm164, %v122, 0
    %v175 = vsel %vm164, %v123, 0
    %177 = vmatprep.subr.bf16.mxu0 0
    %178 = vmatpush1.bf16.msra.mxu0 0
    %179 = vmatprep.subr.bf16.mxu0 0
    %180 = vmatpush1.bf16.msra.mxu0 0
    %181 = vmatprep.subr.bf16.mxu0 0
    %182 = vmatpush1.bf16.msra.mxu0 0
    %183 = vmatprep.subr.bf16.mxu0 0
    %184 = vmatpush1.bf16.msra.mxu0 0
    %185 = vmatprep.subr.bf16.mxu0 0
    %186 = vmatpush1.bf16.msra.mxu0 0
    %187 = vmatprep.subr.bf16.mxu0 0
    %188 = vmatpush1.bf16.msra.mxu0 0
    %189 = vmatprep.subr.bf16.mxu0 %v153
    %190 = vmatpush1.bf16.msra.mxu0 %v152
    %191 = vmatprep.subr.bf16.mxu0 %v149
    %192 = vmatpush1.bf16.msra.mxu0 %v148
    %193 = vmatprep.subr.bf16.mxu0 0
    %194 = vmatpush2.bf16.msra.mxu0 0
    %195 = vmatprep.subr.bf16.mxu0 0
    %196 = vmatpush2.bf16.msra.mxu0 0
    %197 = vmatprep.subr.bf16.mxu0 0
    %198 = vmatpush2.bf16.msra.mxu0 0
    %199 = vmatprep.subr.bf16.mxu0 0
    %200 = vmatpush2.bf16.msra.mxu0 0
    %201 = vmatprep.subr.bf16.mxu0 0
    %202 = vmatpush2.bf16.msra.mxu0 0
    %203 = vmatprep.subr.bf16.mxu0 0
    %204 = vmatpush2.bf16.msra.mxu0 0
    %205 = vmatprep.subr.bf16.mxu0 0
    %206 = vmatpush2.bf16.msra.mxu0 0
    %207 = vmatprep.subr.bf16.mxu0 0
    %208 = vmatpush2.bf16.msra.mxu0 0
    %209 = vmatprep.mubr.bf16.mxu0 0
    %210 = vmatmul.mubr.bf16.gmra.mxu0 %v166
    %v211 = vpop.f32.mrf.mxu0
    %v212 = vadd.f32 %v87, %v211
    %v213 = vpop.f32.mrf.mxu0
    %v214 = vadd.f32 %v91, %v213
    %v215 = vpop.f32.mrf.mxu0
    %v216 = vadd.f32 %v87, %v215
    %v217 = vpop.f32.mrf.mxu0
    %v218 = vadd.f32 %v91, %v217
    %219 = vmatprep.mubr.bf16.mxu0 0
    %220 = vmatmul.mubr.bf16.gmra.mxu0 %v169
    %v221 = vpop.f32.mrf.mxu0
    %v222 = vadd.f32 %v87, %v221
    %v223 = vpop.f32.mrf.mxu0
    %v224 = vadd.f32 %v91, %v223
    %v225 = vpop.f32.mrf.mxu0
    %v226 = vadd.f32 %v87, %v225
    %v227 = vpop.f32.mrf.mxu0
    %v228 = vadd.f32 %v91, %v227
    %229 = vmatprep.mubr.bf16.mxu0 0
    %230 = vmatmul.mubr.bf16.gmra.mxu0 %v172
    %v231 = vpop.f32.mrf.mxu0
    %v232 = vadd.f32 %v87, %v231
    %v233 = vpop.f32.mrf.mxu0
    %v234 = vadd.f32 %v91, %v233
    %v235 = vpop.f32.mrf.mxu0
    %v236 = vadd.f32 %v87, %v235
    %v237 = vpop.f32.mrf.mxu0
    %v238 = vadd.f32 %v91, %v237
    %239 = vmatprep.mubr.bf16.mxu0 0
    %240 = vmatmul.mubr.bf16.gmra.mxu0 %v175
    %v241 = vpop.f32.mrf.mxu0
    %v242 = vadd.f32 %v87, %v241
    %v243 = vpop.f32.mrf.mxu0
    %v244 = vadd.f32 %v91, %v243
    %v245 = vpop.f32.mrf.mxu0
    %v246 = vadd.f32 %v87, %v245
    %v247 = vpop.f32.mrf.mxu0
    %v248 = vadd.f32 %v91, %v247
    %249 = vdwg.mxu0
    %250 = vmatprep.subr.bf16.mxu0 0
    %251 = vmatpush1.bf16.msra.mxu0 0
    %252 = vmatprep.subr.bf16.mxu0 0
    %253 = vmatpush1.bf16.msra.mxu0 0
    %254 = vmatprep.subr.bf16.mxu0 0
    %255 = vmatpush1.bf16.msra.mxu0 0
    %256 = vmatprep.subr.bf16.mxu0 0
    %257 = vmatpush1.bf16.msra.mxu0 0
    %258 = vmatprep.subr.bf16.mxu0 0
    %259 = vmatpush1.bf16.msra.mxu0 0
    %260 = vmatprep.subr.bf16.mxu0 0
    %261 = vmatpush1.bf16.msra.mxu0 0
    %262 = vmatprep.subr.bf16.mxu0 %v155
    %263 = vmatpush1.bf16.msra.mxu0 %v154
    %264 = vmatprep.subr.bf16.mxu0 %v151
    %265 = vmatpush1.bf16.msra.mxu0 %v150
    %266 = vmatprep.subr.bf16.mxu0 0
    %267 = vmatpush2.bf16.msra.mxu0 0
    %268 = vmatprep.subr.bf16.mxu0 0
    %269 = vmatpush2.bf16.msra.mxu0 0
    %270 = vmatprep.subr.bf16.mxu0 0
    %271 = vmatpush2.bf16.msra.mxu0 0
    %272 = vmatprep.subr.bf16.mxu0 0
    %273 = vmatpush2.bf16.msra.mxu0 0
    %274 = vmatprep.subr.bf16.mxu0 0
    %275 = vmatpush2.bf16.msra.mxu0 0
    %276 = vmatprep.subr.bf16.mxu0 0
    %277 = vmatpush2.bf16.msra.mxu0 0
    %278 = vmatprep.subr.bf16.mxu0 0
    %279 = vmatpush2.bf16.msra.mxu0 0
    %280 = vmatprep.subr.bf16.mxu0 0
    %281 = vmatpush2.bf16.msra.mxu0 0
    %282 = vmatprep.mubr.bf16.mxu0 0
    %283 = vmatmul.mubr.bf16.gmra.mxu0 %v166
    %v284 = vpop.f32.mrf.mxu0
    %v285 = vadd.f32 %v95, %v284
    %v286 = vpop.f32.mrf.mxu0
    %v287 = vadd.f32 %v99, %v286
    %v288 = vpop.f32.mrf.mxu0
    %v289 = vadd.f32 %v95, %v288
    %v290 = vpop.f32.mrf.mxu0
    %v291 = vadd.f32 %v99, %v290
    %292 = vmatprep.mubr.bf16.mxu0 0
    %293 = vmatmul.mubr.bf16.gmra.mxu0 %v169
    %v294 = vpop.f32.mrf.mxu0
    %v295 = vadd.f32 %v95, %v294
    %v296 = vpop.f32.mrf.mxu0
    %v297 = vadd.f32 %v99, %v296
    %v298 = vpop.f32.mrf.mxu0
    %v299 = vadd.f32 %v95, %v298
    %v300 = vpop.f32.mrf.mxu0
    %v301 = vadd.f32 %v99, %v300
    %302 = vmatprep.mubr.bf16.mxu0 0
    %303 = vmatmul.mubr.bf16.gmra.mxu0 %v172
    %v304 = vpop.f32.mrf.mxu0
    %v305 = vadd.f32 %v95, %v304
    %v306 = vpop.f32.mrf.mxu0
    %v307 = vadd.f32 %v99, %v306
    %v308 = vpop.f32.mrf.mxu0
    %v309 = vadd.f32 %v95, %v308
    %v310 = vpop.f32.mrf.mxu0
    %v311 = vadd.f32 %v99, %v310
    %312 = vmatprep.mubr.bf16.mxu0 0
    %313 = vmatmul.mubr.bf16.gmra.mxu0 %v175
    %v314 = vpop.f32.mrf.mxu0
    %v315 = vadd.f32 %v95, %v314
    %v316 = vpop.f32.mrf.mxu0
    %v317 = vadd.f32 %v99, %v316
    %v318 = vpop.f32.mrf.mxu0
    %v319 = vadd.f32 %v95, %v318
    %v320 = vpop.f32.mrf.mxu0
    %v321 = vadd.f32 %v99, %v320
    %322 = vdwg.mxu0
    %323 = vst [vmem:[#allocation2] sm:$0xff] %v212
    %324 = vst [vmem:[#allocation2 + $0x8] sm:$0xff] %v214
    %325 = vst [vmem:[#allocation2 + $0x10] sm:$0xff] %v285
    %326 = vst [vmem:[#allocation2 + $0x18] sm:$0xff] %v287
    %327 = vst [vmem:[#allocation2 + $0x20] sm:$0xff] %v216
    %328 = vst [vmem:[#allocation2 + $0x28] sm:$0xff] %v218
    %329 = vst [vmem:[#allocation2 + $0x30] sm:$0xff] %v289
    %330 = vst [vmem:[#allocation2 + $0x38] sm:$0xff] %v291
    %331 = vst [vmem:[#allocation2 + $0x40] sm:$0xff] %v222
    %332 = vst [vmem:[#allocation2 + $0x48] sm:$0xff] %v224
    %333 = vst [vmem:[#allocation2 + $0x50] sm:$0xff] %v295
    %334 = vst [vmem:[#allocation2 + $0x58] sm:$0xff] %v297
    %335 = vst [vmem:[#allocation2 + $0x60] sm:$0xff] %v226
    %336 = vst [vmem:[#allocation2 + $0x68] sm:$0xff] %v228
    %337 = vst [vmem:[#allocation2 + $0x70] sm:$0xff] %v299
    %338 = vst [vmem:[#allocation2 + $0x78] sm:$0xff] %v301
    %339 = vst [vmem:[#allocation2 + $0x80] sm:$0xff] %v232
    %340 = vst [vmem:[#allocation2 + $0x88] sm:$0xff] %v234
    %341 = vst [vmem:[#allocation2 + $0x90] sm:$0xff] %v305
    %342 = vst [vmem:[#allocation2 + $0x98] sm:$0xff] %v307
    %343 = vst [vmem:[#allocation2 + $0xa0] sm:$0xff] %v236
    %344 = vst [vmem:[#allocation2 + $0xa8] sm:$0xff] %v238
    %345 = vst [vmem:[#allocation2 + $0xb0] sm:$0xff] %v309
    %346 = vst [vmem:[#allocation2 + $0xb8] sm:$0xff] %v311
    %347 = vst [vmem:[#allocation2 + $0xc0] sm:$0xff] %v242
    %348 = vst [vmem:[#allocation2 + $0xc8] sm:$0xff] %v244
    %349 = vst [vmem:[#allocation2 + $0xd0] sm:$0xff] %v315
    %350 = vst [vmem:[#allocation2 + $0xd8] sm:$0xff] %v317
    %351 = vst [vmem:[#allocation2 + $0xe0] sm:$0xff] %v246
    %352 = vst [vmem:[#allocation2 + $0xe8] sm:$0xff] %v248
    %353 = vst [vmem:[#allocation2 + $0xf0] sm:$0xff] %v319
    %354 = vst [vmem:[#allocation2 + $0xf8] sm:$0xff] %v321
    %s355 = smul.u32 0, 4
    %s356 = smul.addr %s355, 8
    %s357 = scalar_lea.vmem [#allocation2], %s356
    %v358 = vld [vmem:[%s357] sm:$0xff]
    %v359 = vld [vmem:[%s357 + $0x8] sm:$0xff]
    %v360 = vld [vmem:[%s357 + $0x10] sm:$0xff]
    %v361 = vld [vmem:[%s357 + $0x18] sm:$0xff]
    %v362 = vld [vmem:[#allocation6] sm:$0xff]
    %v363 = vld [vmem:[#allocation6 + $0x8] sm:$0xff]
    %v364 = vld [vmem:[#allocation6 + $0x10] sm:$0xff]
    %v365 = vld [vmem:[#allocation6 + $0x18] sm:$0xff]
    %v366 = vld [vmem:[#allocation6 + $0x20] sm:$0xff]
    %v367 = vld [vmem:[#allocation6 + $0x28] sm:$0xff]
    %v368 = vld [vmem:[#allocation6 + $0x30] sm:$0xff]
    %v369 = vld [vmem:[#allocation6 + $0x38] sm:$0xff]
    %v370 = vld [vmem:[#allocation6 + $0x40] sm:$0xff]
    %v371 = vld [vmem:[#allocation6 + $0x48] sm:$0xff]
    %v372 = vld [vmem:[#allocation6 + $0x50] sm:$0xff]
    %v373 = vld [vmem:[#allocation6 + $0x58] sm:$0xff]
    %v374 = vld [vmem:[#allocation6 + $0x60] sm:$0xff]
    %v375 = vld [vmem:[#allocation6 + $0x68] sm:$0xff]
    %v376 = vld [vmem:[#allocation6 + $0x70] sm:$0xff]
    %v377 = vld [vmem:[#allocation6 + $0x78] sm:$0xff]
    %v378 = vld [vmem:[#allocation6 + $0x80] sm:$0xff]
    %v379 = vld [vmem:[#allocation6 + $0x88] sm:$0xff]
    %v380 = vld [vmem:[#allocation6 + $0x90] sm:$0xff]
    %v381 = vld [vmem:[#allocation6 + $0x98] sm:$0xff]
    %v382 = vld [vmem:[#allocation6 + $0xa0] sm:$0xff]
    %v383 = vld [vmem:[#allocation6 + $0xa8] sm:$0xff]
    %v384 = vld [vmem:[#allocation6 + $0xb0] sm:$0xff]
    %v385 = vld [vmem:[#allocation6 + $0xb8] sm:$0xff]
    %v386 = vld [vmem:[#allocation6 + $0xc0] sm:$0xff]
    %v387 = vld [vmem:[#allocation6 + $0xc8] sm:$0xff]
    %v388 = vld [vmem:[#allocation6 + $0xd0] sm:$0xff]
    %v389 = vld [vmem:[#allocation6 + $0xd8] sm:$0xff]
    %v390 = vld [vmem:[#allocation6 + $0xe0] sm:$0xff]
    %v391 = vld [vmem:[#allocation6 + $0xe8] sm:$0xff]
    %v392 = vld [vmem:[#allocation6 + $0xf0] sm:$0xff]
    %v393 = vld [vmem:[#allocation6 + $0xf8] sm:$0xff]
    %v426 = vunpack.c.l.b16 %v362
    %v427 = vunpack.c.h.b16 %v362
    %v428 = vunpack.c.l.b16 %v363
    %v429 = vunpack.c.h.b16 %v363
    %v430 = vunpack.c.l.b16 %v364
    %v431 = vunpack.c.h.b16 %v364
    %v432 = vunpack.c.l.b16 %v365
    %v433 = vunpack.c.h.b16 %v365
    %v434 = vunpack.c.l.b16 %v366
    %v435 = vunpack.c.h.b16 %v366
    %v436 = vunpack.c.l.b16 %v367
    %v437 = vunpack.c.h.b16 %v367
    %v438 = vunpack.c.l.b16 %v368
    %v439 = vunpack.c.h.b16 %v368
    %v440 = vunpack.c.l.b16 %v369
    %v441 = vunpack.c.h.b16 %v369
    %v442 = vunpack.c.l.b16 %v370
    %v443 = vunpack.c.h.b16 %v370
    %v444 = vunpack.c.l.b16 %v371
    %v445 = vunpack.c.h.b16 %v371
    %v446 = vunpack.c.l.b16 %v372
    %v447 = vunpack.c.h.b16 %v372
    %v448 = vunpack.c.l.b16 %v373
    %v449 = vunpack.c.h.b16 %v373
    %v450 = vunpack.c.l.b16 %v374
    %v451 = vunpack.c.h.b16 %v374
    %v452 = vunpack.c.l.b16 %v375
    %v453 = vunpack.c.h.b16 %v375
    %v454 = vunpack.c.l.b16 %v376
    %v455 = vunpack.c.h.b16 %v376
    %v456 = vunpack.c.l.b16 %v377
    %v457 = vunpack.c.h.b16 %v377
    %v458 = vunpack.c.l.b16 %v378
    %v459 = vunpack.c.h.b16 %v378
    %v460 = vunpack.c.l.b16 %v379
    %v461 = vunpack.c.h.b16 %v379
    %v462 = vunpack.c.l.b16 %v380
    %v463 = vunpack.c.h.b16 %v380
    %v464 = vunpack.c.l.b16 %v381
    %v465 = vunpack.c.h.b16 %v381
    %v466 = vunpack.c.l.b16 %v382
    %v467 = vunpack.c.h.b16 %v382
    %v468 = vunpack.c.l.b16 %v383
    %v469 = vunpack.c.h.b16 %v383
    %v470 = vunpack.c.l.b16 %v384
    %v471 = vunpack.c.h.b16 %v384
    %v472 = vunpack.c.l.b16 %v385
    %v473 = vunpack.c.h.b16 %v385
    %v474 = vunpack.c.l.b16 %v386
    %v475 = vunpack.c.h.b16 %v386
    %v476 = vunpack.c.l.b16 %v387
    %v477 = vunpack.c.h.b16 %v387
    %v478 = vunpack.c.l.b16 %v388
    %v479 = vunpack.c.h.b16 %v388
    %v480 = vunpack.c.l.b16 %v389
    %v481 = vunpack.c.h.b16 %v389
    %v482 = vunpack.c.l.b16 %v390
    %v483 = vunpack.c.h.b16 %v390
    %v484 = vunpack.c.l.b16 %v391
    %v485 = vunpack.c.h.b16 %v391
    %v486 = vunpack.c.l.b16 %v392
    %v487 = vunpack.c.h.b16 %v392
    %v488 = vunpack.c.l.b16 %v393
    %v489 = vunpack.c.h.b16 %v393
    %v490 = vpack.c.b16 %v430, %v426
    %v491 = vpack.c.b16 %v431, %v427
    %v492 = vpack.c.b16 %v432, %v428
    %v493 = vpack.c.b16 %v433, %v429
    %v494 = vpack.c.b16 %v438, %v434
    %v495 = vpack.c.b16 %v439, %v435
    %v496 = vpack.c.b16 %v440, %v436
    %v497 = vpack.c.b16 %v441, %v437
    %v498 = vpack.c.b16 %v446, %v442
    %v499 = vpack.c.b16 %v447, %v443
    %v500 = vpack.c.b16 %v448, %v444
    %v501 = vpack.c.b16 %v449, %v445
    %v502 = vpack.c.b16 %v454, %v450
    %v503 = vpack.c.b16 %v455, %v451
    %v504 = vpack.c.b16 %v456, %v452
    %v505 = vpack.c.b16 %v457, %v453
    %v506 = vpack.c.b16 %v462, %v458
    %v507 = vpack.c.b16 %v463, %v459
    %v508 = vpack.c.b16 %v464, %v460
    %v509 = vpack.c.b16 %v465, %v461
    %v510 = vpack.c.b16 %v470, %v466
    %v511 = vpack.c.b16 %v471, %v467
    %v512 = vpack.c.b16 %v472, %v468
    %v513 = vpack.c.b16 %v473, %v469
    %v514 = vpack.c.b16 %v478, %v474
    %v515 = vpack.c.b16 %v479, %v475
    %v516 = vpack.c.b16 %v480, %v476
    %v517 = vpack.c.b16 %v481, %v477
    %v518 = vpack.c.b16 %v486, %v482
    %v519 = vpack.c.b16 %v487, %v483
    %v520 = vpack.c.b16 %v488, %v484
    %v521 = vpack.c.b16 %v489, %v485
    %554 = vmatprep.subr.bf16.mxu0 %v519
    %555 = vmatpush1.bf16.msra.mxu0 %v518
    %556 = vmatprep.subr.bf16.mxu0 %v515
    %557 = vmatpush1.bf16.msra.mxu0 %v514
    %558 = vmatprep.subr.bf16.mxu0 %v511
    %559 = vmatpush1.bf16.msra.mxu0 %v510
    %560 = vmatprep.subr.bf16.mxu0 %v507
    %561 = vmatpush1.bf16.msra.mxu0 %v506
    %562 = vmatprep.subr.bf16.mxu0 %v503
    %563 = vmatpush1.bf16.msra.mxu0 %v502
    %564 = vmatprep.subr.bf16.mxu0 %v499
    %565 = vmatpush1.bf16.msra.mxu0 %v498
    %566 = vmatprep.subr.bf16.mxu0 %v495
    %567 = vmatpush1.bf16.msra.mxu0 %v494
    %568 = vmatprep.subr.bf16.mxu0 %v491
    %569 = vmatpush1.bf16.msra.mxu0 %v490
    %570 = vmatprep.subr.bf16.mxu0 0
    %571 = vmatpush2.bf16.msra.mxu0 0
    %572 = vmatprep.subr.bf16.mxu0 0
    %573 = vmatpush2.bf16.msra.mxu0 0
    %574 = vmatprep.subr.bf16.mxu0 0
    %575 = vmatpush2.bf16.msra.mxu0 0
    %576 = vmatprep.subr.bf16.mxu0 0
    %577 = vmatpush2.bf16.msra.mxu0 0
    %578 = vmatprep.subr.bf16.mxu0 0
    %579 = vmatpush2.bf16.msra.mxu0 0
    %580 = vmatprep.subr.bf16.mxu0 0
    %581 = vmatpush2.bf16.msra.mxu0 0
    %582 = vmatprep.subr.bf16.mxu0 0
    %583 = vmatpush2.bf16.msra.mxu0 0
    %584 = vmatprep.subr.bf16.mxu0 0
    %585 = vmatpush2.bf16.msra.mxu0 0
    %586 = vmatprep.mubr.bf16.mxu0 0
    %587 = vmatmul.mubr.bf16.gmra.mxu0 0
    %v588 = vpop.f32.mrf.mxu0
    %v589 = vadd.f32 0.0, %v588
    %v590 = vpop.f32.mrf.mxu0
    %v591 = vadd.f32 0.0, %v590
    %v592 = vpop.f32.mrf.mxu0
    %v593 = vpop.f32.mrf.mxu0
    %594 = vdwg.mxu0
    %595 = vmatprep.subr.bf16.mxu0 %v521
    %596 = vmatpush1.bf16.msra.mxu0 %v520
    %597 = vmatprep.subr.bf16.mxu0 %v517
    %598 = vmatpush1.bf16.msra.mxu0 %v516
    %599 = vmatprep.subr.bf16.mxu0 %v513
    %600 = vmatpush1.bf16.msra.mxu0 %v512
    %601 = vmatprep.subr.bf16.mxu0 %v509
    %602 = vmatpush1.bf16.msra.mxu0 %v508
    %603 = vmatprep.subr.bf16.mxu0 %v505
    %604 = vmatpush1.bf16.msra.mxu0 %v504
    %605 = vmatprep.subr.bf16.mxu0 %v501
    %606 = vmatpush1.bf16.msra.mxu0 %v500
    %607 = vmatprep.subr.bf16.mxu0 %v497
    %608 = vmatpush1.bf16.msra.mxu0 %v496
    %609 = vmatprep.subr.bf16.mxu0 %v493
    %610 = vmatpush1.bf16.msra.mxu0 %v492
    %611 = vmatprep.subr.bf16.mxu0 0
    %612 = vmatpush2.bf16.msra.mxu0 0
    %613 = vmatprep.subr.bf16.mxu0 0
    %614 = vmatpush2.bf16.msra.mxu0 0
    %615 = vmatprep.subr.bf16.mxu0 0
    %616 = vmatpush2.bf16.msra.mxu0 0
    %617 = vmatprep.subr.bf16.mxu0 0
    %618 = vmatpush2.bf16.msra.mxu0 0
    %619 = vmatprep.subr.bf16.mxu0 0
    %620 = vmatpush2.bf16.msra.mxu0 0
    %621 = vmatprep.subr.bf16.mxu0 0
    %622 = vmatpush2.bf16.msra.mxu0 0
    %623 = vmatprep.subr.bf16.mxu0 0
    %624 = vmatpush2.bf16.msra.mxu0 0
    %625 = vmatprep.subr.bf16.mxu0 0
    %626 = vmatpush2.bf16.msra.mxu0 0
    %627 = vmatprep.mubr.bf16.mxu0 0
    %628 = vmatmul.mubr.bf16.gmra.mxu0 0
    %v629 = vpop.f32.mrf.mxu0
    %v630 = vadd.f32 0.0, %v629
    %v631 = vpop.f32.mrf.mxu0
    %v632 = vadd.f32 0.0, %v631
    %v633 = vpop.f32.mrf.mxu0
    %v634 = vpop.f32.mrf.mxu0
    %635 = vdwg.mxu0
    %v636 = vadd.f32 %v358, %v589
    %v637 = vadd.f32 %v359, %v591
    %v638 = vadd.f32 %v360, %v630
    %v639 = vadd.f32 %v361, %v632
    %v640 = vxor.u32 %v636, 2147483648
    %v641 = vmul.f32 %v640, 1.442695
    %v642 = vpow.pop %v641
    %v643 = vadd.f32 %v642, 1.0
    %v644 = vrcp.pop %v643
    %v645 = vmul.f32 1.0, %v644
    %v646 = vxor.u32 %v637, 2147483648
    %v647 = vmul.f32 %v646, 1.442695
    %v648 = vpow.pop %v647
    %v649 = vadd.f32 %v648, 1.0
    %v650 = vrcp.pop %v649
    %v651 = vmul.f32 1.0, %v650
    %v652 = vtanh.pop %v638
    %v653 = vxor.u32 %v639, 2147483648
    %v654 = vmul.f32 %v653, 1.442695
    %v655 = vpow.pop %v654
    %v656 = vadd.f32 %v655, 1.0
    %v657 = vrcp.pop %v656
    %v658 = vmul.f32 1.0, %v657
    %v659 = vmul.f32 %v651, 0.0
    %v660 = vmul.f32 %v645, %v652
    %v661 = vadd.f32 %v659, %v660
    %v662 = vtanh.pop %v661
    %v663 = vmul.f32 %v658, %v662
    %s664 = smul.u32 1, 4
    %s665 = smul.addr %s664, 8
    %s666 = scalar_lea.vmem [#allocation2], %s665
    %v667 = vld [vmem:[%s666] sm:$0xff]
    %v668 = vld [vmem:[%s666 + $0x8] sm:$0xff]
    %v669 = vld [vmem:[%s666 + $0x10] sm:$0xff]
    %v670 = vld [vmem:[%s666 + $0x18] sm:$0xff]
    %v671 = vpack.c.bf16 %v663, %v663
    %672 = vmatprep.subr.bf16.mxu0 %v519
    %673 = vmatpush1.bf16.msra.mxu0 %v518
    %674 = vmatprep.subr.bf16.mxu0 %v515
    %675 = vmatpush1.bf16.msra.mxu0 %v514
    %676 = vmatprep.subr.bf16.mxu0 %v511
    %677 = vmatpush1.bf16.msra.mxu0 %v510
    %678 = vmatprep.subr.bf16.mxu0 %v507
    %679 = vmatpush1.bf16.msra.mxu0 %v506
    %680 = vmatprep.subr.bf16.mxu0 %v503
    %681 = vmatpush1.bf16.msra.mxu0 %v502
    %682 = vmatprep.subr.bf16.mxu0 %v499
    %683 = vmatpush1.bf16.msra.mxu0 %v498
    %684 = vmatprep.subr.bf16.mxu0 %v495
    %685 = vmatpush1.bf16.msra.mxu0 %v494
    %686 = vmatprep.subr.bf16.mxu0 %v491
    %687 = vmatpush1.bf16.msra.mxu0 %v490
    %688 = vmatprep.subr.bf16.mxu0 0
    %689 = vmatpush2.bf16.msra.mxu0 0
    %690 = vmatprep.subr.bf16.mxu0 0
    %691 = vmatpush2.bf16.msra.mxu0 0
    %692 = vmatprep.subr.bf16.mxu0 0
    %693 = vmatpush2.bf16.msra.mxu0 0
    %694 = vmatprep.subr.bf16.mxu0 0
    %695 = vmatpush2.bf16.msra.mxu0 0
    %696 = vmatprep.subr.bf16.mxu0 0
    %697 = vmatpush2.bf16.msra.mxu0 0
    %698 = vmatprep.subr.bf16.mxu0 0
    %699 = vmatpush2.bf16.msra.mxu0 0
    %700 = vmatprep.subr.bf16.mxu0 0
    %701 = vmatpush2.bf16.msra.mxu0 0
    %702 = vmatprep.subr.bf16.mxu0 0
    %703 = vmatpush2.bf16.msra.mxu0 0
    %704 = vmatprep.mubr.bf16.mxu0 0
    %705 = vmatmul.mubr.bf16.gmra.mxu0 %v671
    %v706 = vpop.f32.mrf.mxu0
    %v707 = vadd.f32 0.0, %v706
    %v708 = vpop.f32.mrf.mxu0
    %v709 = vadd.f32 0.0, %v708
    %v710 = vpop.f32.mrf.mxu0
    %v711 = vpop.f32.mrf.mxu0
    %712 = vdwg.mxu0
    %713 = vmatprep.subr.bf16.mxu0 %v521
    %714 = vmatpush1.bf16.msra.mxu0 %v520
    %715 = vmatprep.subr.bf16.mxu0 %v517
    %716 = vmatpush1.bf16.msra.mxu0 %v516
    %717 = vmatprep.subr.bf16.mxu0 %v513
    %718 = vmatpush1.bf16.msra.mxu0 %v512
    %719 = vmatprep.subr.bf16.mxu0 %v509
    %720 = vmatpush1.bf16.msra.mxu0 %v508
    %721 = vmatprep.subr.bf16.mxu0 %v505
    %722 = vmatpush1.bf16.msra.mxu0 %v504
    %723 = vmatprep.subr.bf16.mxu0 %v501
    %724 = vmatpush1.bf16.msra.mxu0 %v500
    %725 = vmatprep.subr.bf16.mxu0 %v497
    %726 = vmatpush1.bf16.msra.mxu0 %v496
    %727 = vmatprep.subr.bf16.mxu0 %v493
    %728 = vmatpush1.bf16.msra.mxu0 %v492
    %729 = vmatprep.subr.bf16.mxu0 0
    %730 = vmatpush2.bf16.msra.mxu0 0
    %731 = vmatprep.subr.bf16.mxu0 0
    %732 = vmatpush2.bf16.msra.mxu0 0
    %733 = vmatprep.subr.bf16.mxu0 0
    %734 = vmatpush2.bf16.msra.mxu0 0
    %735 = vmatprep.subr.bf16.mxu0 0
    %736 = vmatpush2.bf16.msra.mxu0 0
    %737 = vmatprep.subr.bf16.mxu0 0
    %738 = vmatpush2.bf16.msra.mxu0 0
    %739 = vmatprep.subr.bf16.mxu0 0
    %740 = vmatpush2.bf16.msra.mxu0 0
    %741 = vmatprep.subr.bf16.mxu0 0
    %742 = vmatpush2.bf16.msra.mxu0 0
    %743 = vmatprep.subr.bf16.mxu0 0
    %744 = vmatpush2.bf16.msra.mxu0 0
    %745 = vmatprep.mubr.bf16.mxu0 0
    %746 = vmatmul.mubr.bf16.gmra.mxu0 %v671
    %v747 = vpop.f32.mrf.mxu0
    %v748 = vadd.f32 0.0, %v747
    %v749 = vpop.f32.mrf.mxu0
    %v750 = vadd.f32 0.0, %v749
    %v751 = vpop.f32.mrf.mxu0
    %v752 = vpop.f32.mrf.mxu0
    %753 = vdwg.mxu0
    %v754 = vadd.f32 %v667, %v707
    %v755 = vadd.f32 %v668, %v709
    %v756 = vadd.f32 %v669, %v748
    %v757 = vadd.f32 %v670, %v750
    %v758 = vxor.u32 %v754, 2147483648
    %v759 = vmul.f32 %v758, 1.442695
    %v760 = vpow.pop %v759
    %v761 = vadd.f32 %v760, 1.0
    %v762 = vrcp.pop %v761
    %v763 = vmul.f32 1.0, %v762
    %v764 = vxor.u32 %v755, 2147483648
    %v765 = vmul.f32 %v764, 1.442695
    %v766 = vpow.pop %v765
    %v767 = vadd.f32 %v766, 1.0
    %v768 = vrcp.pop %v767
    %v769 = vmul.f32 1.0, %v768
    %v770 = vtanh.pop %v756
    %v771 = vxor.u32 %v757, 2147483648
    %v772 = vmul.f32 %v771, 1.442695
    %v773 = vpow.pop %v772
    %v774 = vadd.f32 %v773, 1.0
    %v775 = vrcp.pop %v774
    %v776 = vmul.f32 1.0, %v775
    %v777 = vmul.f32 %v769, %v661
    %v778 = vmul.f32 %v763, %v770
    %v779 = vadd.f32 %v777, %v778
    %v780 = vtanh.pop %v779
    %v781 = vmul.f32 %v776, %v780
    %s782 = smul.u32 2, 4
    %s783 = smul.addr %s782, 8
    %s784 = scalar_lea.vmem [#allocation2], %s783
    %v785 = vld [vmem:[%s784] sm:$0xff]
    %v786 = vld [vmem:[%s784 + $0x8] sm:$0xff]
    %v787 = vld [vmem:[%s784 + $0x10] sm:$0xff]
    %v788 = vld [vmem:[%s784 + $0x18] sm:$0xff]
    %v789 = vpack.c.bf16 %v781, %v781
    %790 = vmatprep.subr.bf16.mxu0 %v519
    %791 = vmatpush1.bf16.msra.mxu0 %v518
    %792 = vmatprep.subr.bf16.mxu0 %v515
    %793 = vmatpush1.bf16.msra.mxu0 %v514
    %794 = vmatprep.subr.bf16.mxu0 %v511
    %795 = vmatpush1.bf16.msra.mxu0 %v510
    %796 = vmatprep.subr.bf16.mxu0 %v507
    %797 = vmatpush1.bf16.msra.mxu0 %v506
    %798 = vmatprep.subr.bf16.mxu0 %v503
    %799 = vmatpush1.bf16.msra.mxu0 %v502
    %800 = vmatprep.subr.bf16.mxu0 %v499
    %801 = vmatpush1.bf16.msra.mxu0 %v498
    %802 = vmatprep.subr.bf16.mxu0 %v495
    %803 = vmatpush1.bf16.msra.mxu0 %v494
    %804 = vmatprep.subr.bf16.mxu0 %v491
    %805 = vmatpush1.bf16.msra.mxu0 %v490
    %806 = vmatprep.subr.bf16.mxu0 0
    %807 = vmatpush2.bf16.msra.mxu0 0
    %808 = vmatprep.subr.bf16.mxu0 0
    %809 = vmatpush2.bf16.msra.mxu0 0
    %810 = vmatprep.subr.bf16.mxu0 0
    %811 = vmatpush2.bf16.msra.mxu0 0
    %812 = vmatprep.subr.bf16.mxu0 0
    %813 = vmatpush2.bf16.msra.mxu0 0
    %814 = vmatprep.subr.bf16.mxu0 0
    %815 = vmatpush2.bf16.msra.mxu0 0
    %816 = vmatprep.subr.bf16.mxu0 0
    %817 = vmatpush2.bf16.msra.mxu0 0
    %818 = vmatprep.subr.bf16.mxu0 0
    %819 = vmatpush2.bf16.msra.mxu0 0
    %820 = vmatprep.subr.bf16.mxu0 0
    %821 = vmatpush2.bf16.msra.mxu0 0
    %822 = vmatprep.mubr.bf16.mxu0 0
    %823 = vmatmul.mubr.bf16.gmra.mxu0 %v789
    %v824 = vpop.f32.mrf.mxu0
    %v825 = vadd.f32 0.0, %v824
    %v826 = vpop.f32.mrf.mxu0
    %v827 = vadd.f32 0.0, %v826
    %v828 = vpop.f32.mrf.mxu0
    %v829 = vpop.f32.mrf.mxu0
    %830 = vdwg.mxu0
    %831 = vmatprep.subr.bf16.mxu0 %v521
    %832 = vmatpush1.bf16.msra.mxu0 %v520
    %833 = vmatprep.subr.bf16.mxu0 %v517
    %834 = vmatpush1.bf16.msra.mxu0 %v516
    %835 = vmatprep.subr.bf16.mxu0 %v513
    %836 = vmatpush1.bf16.msra.mxu0 %v512
    %837 = vmatprep.subr.bf16.mxu0 %v509
    %838 = vmatpush1.bf16.msra.mxu0 %v508
    %839 = vmatprep.subr.bf16.mxu0 %v505
    %840 = vmatpush1.bf16.msra.mxu0 %v504
    %841 = vmatprep.subr.bf16.mxu0 %v501
    %842 = vmatpush1.bf16.msra.mxu0 %v500
    %843 = vmatprep.subr.bf16.mxu0 %v497
    %844 = vmatpush1.bf16.msra.mxu0 %v496
    %845 = vmatprep.subr.bf16.mxu0 %v493
    %846 = vmatpush1.bf16.msra.mxu0 %v492
    %847 = vmatprep.subr.bf16.mxu0 0
    %848 = vmatpush2.bf16.msra.mxu0 0
    %849 = vmatprep.subr.bf16.mxu0 0
    %850 = vmatpush2.bf16.msra.mxu0 0
    %851 = vmatprep.subr.bf16.mxu0 0
    %852 = vmatpush2.bf16.msra.mxu0 0
    %853 = vmatprep.subr.bf16.mxu0 0
    %854 = vmatpush2.bf16.msra.mxu0 0
    %855 = vmatprep.subr.bf16.mxu0 0
    %856 = vmatpush2.bf16.msra.mxu0 0
    %857 = vmatprep.subr.bf16.mxu0 0
    %858 = vmatpush2.bf16.msra.mxu0 0
    %859 = vmatprep.subr.bf16.mxu0 0
    %860 = vmatpush2.bf16.msra.mxu0 0
    %861 = vmatprep.subr.bf16.mxu0 0
    %862 = vmatpush2.bf16.msra.mxu0 0
    %863 = vmatprep.mubr.bf16.mxu0 0
    %864 = vmatmul.mubr.bf16.gmra.mxu0 %v789
    %v865 = vpop.f32.mrf.mxu0
    %v866 = vadd.f32 0.0, %v865
    %v867 = vpop.f32.mrf.mxu0
    %v868 = vadd.f32 0.0, %v867
    %v869 = vpop.f32.mrf.mxu0
    %v870 = vpop.f32.mrf.mxu0
    %871 = vdwg.mxu0
    %v872 = vadd.f32 %v785, %v825
    %v873 = vadd.f32 %v786, %v827
    %v874 = vadd.f32 %v787, %v866
    %v875 = vadd.f32 %v788, %v868
    %v876 = vxor.u32 %v872, 2147483648
    %v877 = vmul.f32 %v876, 1.442695
    %v878 = vpow.pop %v877
    %v879 = vadd.f32 %v878, 1.0
    %v880 = vrcp.pop %v879
    %v881 = vmul.f32 1.0, %v880
    %v882 = vxor.u32 %v873, 2147483648
    %v883 = vmul.f32 %v882, 1.442695
    %v884 = vpow.pop %v883
    %v885 = vadd.f32 %v884, 1.0
    %v886 = vrcp.pop %v885
    %v887 = vmul.f32 1.0, %v886
    %v888 = vtanh.pop %v874
    %v889 = vxor.u32 %v875, 2147483648
    %v890 = vmul.f32 %v889, 1.442695
    %v891 = vpow.pop %v890
    %v892 = vadd.f32 %v891, 1.0
    %v893 = vrcp.pop %v892
    %v894 = vmul.f32 1.0, %v893
    %v895 = vmul.f32 %v887, %v779
    %v896 = vmul.f32 %v881, %v888
    %v897 = vadd.f32 %v895, %v896
    %v898 = vtanh.pop %v897
    %v899 = vmul.f32 %v894, %v898
    %s900 = smul.u32 3, 4
    %s901 = smul.addr %s900, 8
    %s902 = scalar_lea.vmem [#allocation2], %s901
    %v903 = vld [vmem:[%s902] sm:$0xff]
    %v904 = vld [vmem:[%s902 + $0x8] sm:$0xff]
    %v905 = vld [vmem:[%s902 + $0x10] sm:$0xff]
    %v906 = vld [vmem:[%s902 + $0x18] sm:$0xff]
    %v907 = vpack.c.bf16 %v899, %v899
    %908 = vmatprep.subr.bf16.mxu0 %v519
    %909 = vmatpush1.bf16.msra.mxu0 %v518
    %910 = vmatprep.subr.bf16.mxu0 %v515
    %911 = vmatpush1.bf16.msra.mxu0 %v514
    %912 = vmatprep.subr.bf16.mxu0 %v511
    %913 = vmatpush1.bf16.msra.mxu0 %v510
    %914 = vmatprep.subr.bf16.mxu0 %v507
    %915 = vmatpush1.bf16.msra.mxu0 %v506
    %916 = vmatprep.subr.bf16.mxu0 %v503
    %917 = vmatpush1.bf16.msra.mxu0 %v502
    %918 = vmatprep.subr.bf16.mxu0 %v499
    %919 = vmatpush1.bf16.msra.mxu0 %v498
    %920 = vmatprep.subr.bf16.mxu0 %v495
    %921 = vmatpush1.bf16.msra.mxu0 %v494
    %922 = vmatprep.subr.bf16.mxu0 %v491
    %923 = vmatpush1.bf16.msra.mxu0 %v490
    %924 = vmatprep.subr.bf16.mxu0 0
    %925 = vmatpush2.bf16.msra.mxu0 0
    %926 = vmatprep.subr.bf16.mxu0 0
    %927 = vmatpush2.bf16.msra.mxu0 0
    %928 = vmatprep.subr.bf16.mxu0 0
    %929 = vmatpush2.bf16.msra.mxu0 0
    %930 = vmatprep.subr.bf16.mxu0 0
    %931 = vmatpush2.bf16.msra.mxu0 0
    %932 = vmatprep.subr.bf16.mxu0 0
    %933 = vmatpush2.bf16.msra.mxu0 0
    %934 = vmatprep.subr.bf16.mxu0 0
    %935 = vmatpush2.bf16.msra.mxu0 0
    %936 = vmatprep.subr.bf16.mxu0 0
    %937 = vmatpush2.bf16.msra.mxu0 0
    %938 = vmatprep.subr.bf16.mxu0 0
    %939 = vmatpush2.bf16.msra.mxu0 0
    %940 = vmatprep.mubr.bf16.mxu0 0
    %941 = vmatmul.mubr.bf16.gmra.mxu0 %v907
    %v942 = vpop.f32.mrf.mxu0
    %v943 = vadd.f32 0.0, %v942
    %v944 = vpop.f32.mrf.mxu0
    %v945 = vadd.f32 0.0, %v944
    %v946 = vpop.f32.mrf.mxu0
    %v947 = vpop.f32.mrf.mxu0
    %948 = vdwg.mxu0
    %949 = vmatprep.subr.bf16.mxu0 %v521
    %950 = vmatpush1.bf16.msra.mxu0 %v520
    %951 = vmatprep.subr.bf16.mxu0 %v517
    %952 = vmatpush1.bf16.msra.mxu0 %v516
    %953 = vmatprep.subr.bf16.mxu0 %v513
    %954 = vmatpush1.bf16.msra.mxu0 %v512
    %955 = vmatprep.subr.bf16.mxu0 %v509
    %956 = vmatpush1.bf16.msra.mxu0 %v508
    %957 = vmatprep.subr.bf16.mxu0 %v505
    %958 = vmatpush1.bf16.msra.mxu0 %v504
    %959 = vmatprep.subr.bf16.mxu0 %v501
    %960 = vmatpush1.bf16.msra.mxu0 %v500
    %961 = vmatprep.subr.bf16.mxu0 %v497
    %962 = vmatpush1.bf16.msra.mxu0 %v496
    %963 = vmatprep.subr.bf16.mxu0 %v493
    %964 = vmatpush1.bf16.msra.mxu0 %v492
    %965 = vmatprep.subr.bf16.mxu0 0
    %966 = vmatpush2.bf16.msra.mxu0 0
    %967 = vmatprep.subr.bf16.mxu0 0
    %968 = vmatpush2.bf16.msra.mxu0 0
    %969 = vmatprep.subr.bf16.mxu0 0
    %970 = vmatpush2.bf16.msra.mxu0 0
    %971 = vmatprep.subr.bf16.mxu0 0
    %972 = vmatpush2.bf16.msra.mxu0 0
    %973 = vmatprep.subr.bf16.mxu0 0
    %974 = vmatpush2.bf16.msra.mxu0 0
    %975 = vmatprep.subr.bf16.mxu0 0
    %976 = vmatpush2.bf16.msra.mxu0 0
    %977 = vmatprep.subr.bf16.mxu0 0
    %978 = vmatpush2.bf16.msra.mxu0 0
    %979 = vmatprep.subr.bf16.mxu0 0
    %980 = vmatpush2.bf16.msra.mxu0 0
    %981 = vmatprep.mubr.bf16.mxu0 0
    %982 = vmatmul.mubr.bf16.gmra.mxu0 %v907
    %v983 = vpop.f32.mrf.mxu0
    %v984 = vadd.f32 0.0, %v983
    %v985 = vpop.f32.mrf.mxu0
    %v986 = vadd.f32 0.0, %v985
    %v987 = vpop.f32.mrf.mxu0
    %v988 = vpop.f32.mrf.mxu0
    %989 = vdwg.mxu0
    %v990 = vadd.f32 %v903, %v943
    %v991 = vadd.f32 %v904, %v945
    %v992 = vadd.f32 %v905, %v984
    %v993 = vadd.f32 %v906, %v986
    %v994 = vxor.u32 %v990, 2147483648
    %v995 = vmul.f32 %v994, 1.442695
    %v996 = vpow.pop %v995
    %v997 = vadd.f32 %v996, 1.0
    %v998 = vrcp.pop %v997
    %v999 = vmul.f32 1.0, %v998
    %v1000 = vxor.u32 %v991, 2147483648
    %v1001 = vmul.f32 %v1000, 1.442695
    %v1002 = vpow.pop %v1001
    %v1003 = vadd.f32 %v1002, 1.0
    %v1004 = vrcp.pop %v1003
    %v1005 = vmul.f32 1.0, %v1004
    %v1006 = vtanh.pop %v992
    %v1007 = vxor.u32 %v993, 2147483648
    %v1008 = vmul.f32 %v1007, 1.442695
    %v1009 = vpow.pop %v1008
    %v1010 = vadd.f32 %v1009, 1.0
    %v1011 = vrcp.pop %v1010
    %v1012 = vmul.f32 1.0, %v1011
    %v1013 = vmul.f32 %v1005, %v897
    %v1014 = vmul.f32 %v999, %v1006
    %v1015 = vadd.f32 %v1013, %v1014
    %v1016 = vtanh.pop %v1015
    %v1017 = vmul.f32 %v1012, %v1016
    %s1018 = smul.u32 4, 4
    %s1019 = smul.addr %s1018, 8
    %s1020 = scalar_lea.vmem [#allocation2], %s1019
    %v1021 = vld [vmem:[%s1020] sm:$0xff]
    %v1022 = vld [vmem:[%s1020 + $0x8] sm:$0xff]
    %v1023 = vld [vmem:[%s1020 + $0x10] sm:$0xff]
    %v1024 = vld [vmem:[%s1020 + $0x18] sm:$0xff]
    %v1025 = vpack.c.bf16 %v1017, %v1017
    %1026 = vmatprep.subr.bf16.mxu0 %v519
    %1027 = vmatpush1.bf16.msra.mxu0 %v518
    %1028 = vmatprep.subr.bf16.mxu0 %v515
    %1029 = vmatpush1.bf16.msra.mxu0 %v514
    %1030 = vmatprep.subr.bf16.mxu0 %v511
    %1031 = vmatpush1.bf16.msra.mxu0 %v510
    %1032 = vmatprep.subr.bf16.mxu0 %v507
    %1033 = vmatpush1.bf16.msra.mxu0 %v506
    %1034 = vmatprep.subr.bf16.mxu0 %v503
    %1035 = vmatpush1.bf16.msra.mxu0 %v502
    %1036 = vmatprep.subr.bf16.mxu0 %v499
    %1037 = vmatpush1.bf16.msra.mxu0 %v498
    %1038 = vmatprep.subr.bf16.mxu0 %v495
    %1039 = vmatpush1.bf16.msra.mxu0 %v494
    %1040 = vmatprep.subr.bf16.mxu0 %v491
    %1041 = vmatpush1.bf16.msra.mxu0 %v490
    %1042 = vmatprep.subr.bf16.mxu0 0
    %1043 = vmatpush2.bf16.msra.mxu0 0
    %1044 = vmatprep.subr.bf16.mxu0 0
    %1045 = vmatpush2.bf16.msra.mxu0 0
    %1046 = vmatprep.subr.bf16.mxu0 0
    %1047 = vmatpush2.bf16.msra.mxu0 0
    %1048 = vmatprep.subr.bf16.mxu0 0
    %1049 = vmatpush2.bf16.msra.mxu0 0
    %1050 = vmatprep.subr.bf16.mxu0 0
    %1051 = vmatpush2.bf16.msra.mxu0 0
    %1052 = vmatprep.subr.bf16.mxu0 0
    %1053 = vmatpush2.bf16.msra.mxu0 0
    %1054 = vmatprep.subr.bf16.mxu0 0
    %1055 = vmatpush2.bf16.msra.mxu0 0
    %1056 = vmatprep.subr.bf16.mxu0 0
    %1057 = vmatpush2.bf16.msra.mxu0 0
    %1058 = vmatprep.mubr.bf16.mxu0 0
    %1059 = vmatmul.mubr.bf16.gmra.mxu0 %v1025
    %v1060 = vpop.f32.mrf.mxu0
    %v1061 = vadd.f32 0.0, %v1060
    %v1062 = vpop.f32.mrf.mxu0
    %v1063 = vadd.f32 0.0, %v1062
    %v1064 = vpop.f32.mrf.mxu0
    %v1065 = vpop.f32.mrf.mxu0
    %1066 = vdwg.mxu0
    %1067 = vmatprep.subr.bf16.mxu0 %v521
    %1068 = vmatpush1.bf16.msra.mxu0 %v520
    %1069 = vmatprep.subr.bf16.mxu0 %v517
    %1070 = vmatpush1.bf16.msra.mxu0 %v516
    %1071 = vmatprep.subr.bf16.mxu0 %v513
    %1072 = vmatpush1.bf16.msra.mxu0 %v512
    %1073 = vmatprep.subr.bf16.mxu0 %v509
    %1074 = vmatpush1.bf16.msra.mxu0 %v508
    %1075 = vmatprep.subr.bf16.mxu0 %v505
    %1076 = vmatpush1.bf16.msra.mxu0 %v504
    %1077 = vmatprep.subr.bf16.mxu0 %v501
    %1078 = vmatpush1.bf16.msra.mxu0 %v500
    %1079 = vmatprep.subr.bf16.mxu0 %v497
    %1080 = vmatpush1.bf16.msra.mxu0 %v496
    %1081 = vmatprep.subr.bf16.mxu0 %v493
    %1082 = vmatpush1.bf16.msra.mxu0 %v492
    %1083 = vmatprep.subr.bf16.mxu0 0
    %1084 = vmatpush2.bf16.msra.mxu0 0
    %1085 = vmatprep.subr.bf16.mxu0 0
    %1086 = vmatpush2.bf16.msra.mxu0 0
    %1087 = vmatprep.subr.bf16.mxu0 0
    %1088 = vmatpush2.bf16.msra.mxu0 0
    %1089 = vmatprep.subr.bf16.mxu0 0
    %1090 = vmatpush2.bf16.msra.mxu0 0
    %1091 = vmatprep.subr.bf16.mxu0 0
    %1092 = vmatpush2.bf16.msra.mxu0 0
    %1093 = vmatprep.subr.bf16.mxu0 0
    %1094 = vmatpush2.bf16.msra.mxu0 0
    %1095 = vmatprep.subr.bf16.mxu0 0
    %1096 = vmatpush2.bf16.msra.mxu0 0
    %1097 = vmatprep.subr.bf16.mxu0 0
    %1098 = vmatpush2.bf16.msra.mxu0 0
    %1099 = vmatprep.mubr.bf16.mxu0 0
    %1100 = vmatmul.mubr.bf16.gmra.mxu0 %v1025
    %v1101 = vpop.f32.mrf.mxu0
    %v1102 = vadd.f32 0.0, %v1101
    %v1103 = vpop.f32.mrf.mxu0
    %v1104 = vadd.f32 0.0, %v1103
    %v1105 = vpop.f32.mrf.mxu0
    %v1106 = vpop.f32.mrf.mxu0
    %1107 = vdwg.mxu0
    %v1108 = vadd.f32 %v1021, %v1061
    %v1109 = vadd.f32 %v1022, %v1063
    %v1110 = vadd.f32 %v1023, %v1102
    %v1111 = vadd.f32 %v1024, %v1104
    %v1112 = vxor.u32 %v1108, 2147483648
    %v1113 = vmul.f32 %v1112, 1.442695
    %v1114 = vpow.pop %v1113
    %v1115 = vadd.f32 %v1114, 1.0
    %v1116 = vrcp.pop %v1115
    %v1117 = vmul.f32 1.0, %v1116
    %v1118 = vxor.u32 %v1109, 2147483648
    %v1119 = vmul.f32 %v1118, 1.442695
    %v1120 = vpow.pop %v1119
    %v1121 = vadd.f32 %v1120, 1.0
    %v1122 = vrcp.pop %v1121
    %v1123 = vmul.f32 1.0, %v1122
    %v1124 = vtanh.pop %v1110
    %v1125 = vxor.u32 %v1111, 2147483648
    %v1126 = vmul.f32 %v1125, 1.442695
    %v1127 = vpow.pop %v1126
    %v1128 = vadd.f32 %v1127, 1.0
    %v1129 = vrcp.pop %v1128
    %v1130 = vmul.f32 1.0, %v1129
    %v1131 = vmul.f32 %v1123, %v1015
    %v1132 = vmul.f32 %v1117, %v1124
    %v1133 = vadd.f32 %v1131, %v1132
    %v1134 = vtanh.pop %v1133
    %v1135 = vmul.f32 %v1130, %v1134
    %s1136 = smul.u32 5, 4
    %s1137 = smul.addr %s1136, 8
    %s1138 = scalar_lea.vmem [#allocation2], %s1137
    %v1139 = vld [vmem:[%s1138] sm:$0xff]
    %v1140 = vld [vmem:[%s1138 + $0x8] sm:$0xff]
    %v1141 = vld [vmem:[%s1138 + $0x10] sm:$0xff]
    %v1142 = vld [vmem:[%s1138 + $0x18] sm:$0xff]
    %v1143 = vpack.c.bf16 %v1135, %v1135
    %1144 = vmatprep.subr.bf16.mxu0 %v519
    %1145 = vmatpush1.bf16.msra.mxu0 %v518
    %1146 = vmatprep.subr.bf16.mxu0 %v515
    %1147 = vmatpush1.bf16.msra.mxu0 %v514
    %1148 = vmatprep.subr.bf16.mxu0 %v511
    %1149 = vmatpush1.bf16.msra.mxu0 %v510
    %1150 = vmatprep.subr.bf16.mxu0 %v507
    %1151 = vmatpush1.bf16.msra.mxu0 %v506
    %1152 = vmatprep.subr.bf16.mxu0 %v503
    %1153 = vmatpush1.bf16.msra.mxu0 %v502
    %1154 = vmatprep.subr.bf16.mxu0 %v499
    %1155 = vmatpush1.bf16.msra.mxu0 %v498
    %1156 = vmatprep.subr.bf16.mxu0 %v495
    %1157 = vmatpush1.bf16.msra.mxu0 %v494
    %1158 = vmatprep.subr.bf16.mxu0 %v491
    %1159 = vmatpush1.bf16.msra.mxu0 %v490
    %1160 = vmatprep.subr.bf16.mxu0 0
    %1161 = vmatpush2.bf16.msra.mxu0 0
    %1162 = vmatprep.subr.bf16.mxu0 0
    %1163 = vmatpush2.bf16.msra.mxu0 0
    %1164 = vmatprep.subr.bf16.mxu0 0
    %1165 = vmatpush2.bf16.msra.mxu0 0
    %1166 = vmatprep.subr.bf16.mxu0 0
    %1167 = vmatpush2.bf16.msra.mxu0 0
    %1168 = vmatprep.subr.bf16.mxu0 0
    %1169 = vmatpush2.bf16.msra.mxu0 0
    %1170 = vmatprep.subr.bf16.mxu0 0
    %1171 = vmatpush2.bf16.msra.mxu0 0
    %1172 = vmatprep.subr.bf16.mxu0 0
    %1173 = vmatpush2.bf16.msra.mxu0 0
    %1174 = vmatprep.subr.bf16.mxu0 0
    %1175 = vmatpush2.bf16.msra.mxu0 0
    %1176 = vmatprep.mubr.bf16.mxu0 0
    %1177 = vmatmul.mubr.bf16.gmra.mxu0 %v1143
    %v1178 = vpop.f32.mrf.mxu0
    %v1179 = vadd.f32 0.0, %v1178
    %v1180 = vpop.f32.mrf.mxu0
    %v1181 = vadd.f32 0.0, %v1180
    %v1182 = vpop.f32.mrf.mxu0
    %v1183 = vpop.f32.mrf.mxu0
    %1184 = vdwg.mxu0
    %1185 = vmatprep.subr.bf16.mxu0 %v521
    %1186 = vmatpush1.bf16.msra.mxu0 %v520
    %1187 = vmatprep.subr.bf16.mxu0 %v517
    %1188 = vmatpush1.bf16.msra.mxu0 %v516
    %1189 = vmatprep.subr.bf16.mxu0 %v513
    %1190 = vmatpush1.bf16.msra.mxu0 %v512
    %1191 = vmatprep.subr.bf16.mxu0 %v509
    %1192 = vmatpush1.bf16.msra.mxu0 %v508
    %1193 = vmatprep.subr.bf16.mxu0 %v505
    %1194 = vmatpush1.bf16.msra.mxu0 %v504
    %1195 = vmatprep.subr.bf16.mxu0 %v501
    %1196 = vmatpush1.bf16.msra.mxu0 %v500
    %1197 = vmatprep.subr.bf16.mxu0 %v497
    %1198 = vmatpush1.bf16.msra.mxu0 %v496
    %1199 = vmatprep.subr.bf16.mxu0 %v493
    %1200 = vmatpush1.bf16.msra.mxu0 %v492
    %1201 = vmatprep.subr.bf16.mxu0 0
    %1202 = vmatpush2.bf16.msra.mxu0 0
    %1203 = vmatprep.subr.bf16.mxu0 0
    %1204 = vmatpush2.bf16.msra.mxu0 0
    %1205 = vmatprep.subr.bf16.mxu0 0
    %1206 = vmatpush2.bf16.msra.mxu0 0
    %1207 = vmatprep.subr.bf16.mxu0 0
    %1208 = vmatpush2.bf16.msra.mxu0 0
    %1209 = vmatprep.subr.bf16.mxu0 0
    %1210 = vmatpush2.bf16.msra.mxu0 0
    %1211 = vmatprep.subr.bf16.mxu0 0
    %1212 = vmatpush2.bf16.msra.mxu0 0
    %1213 = vmatprep.subr.bf16.mxu0 0
    %1214 = vmatpush2.bf16.msra.mxu0 0
    %1215 = vmatprep.subr.bf16.mxu0 0
    %1216 = vmatpush2.bf16.msra.mxu0 0
    %1217 = vmatprep.mubr.bf16.mxu0 0
    %1218 = vmatmul.mubr.bf16.gmra.mxu0 %v1143
    %v1219 = vpop.f32.mrf.mxu0
    %v1220 = vadd.f32 0.0, %v1219
    %v1221 = vpop.f32.mrf.mxu0
    %v1222 = vadd.f32 0.0, %v1221
    %v1223 = vpop.f32.mrf.mxu0
    %v1224 = vpop.f32.mrf.mxu0
    %1225 = vdwg.mxu0
    %v1226 = vadd.f32 %v1139, %v1179
    %v1227 = vadd.f32 %v1140, %v1181
    %v1228 = vadd.f32 %v1141, %v1220
    %v1229 = vadd.f32 %v1142, %v1222
    %v1230 = vxor.u32 %v1226, 2147483648
    %v1231 = vmul.f32 %v1230, 1.442695
    %v1232 = vpow.pop %v1231
    %v1233 = vadd.f32 %v1232, 1.0
    %v1234 = vrcp.pop %v1233
    %v1235 = vmul.f32 1.0, %v1234
    %v1236 = vxor.u32 %v1227, 2147483648
    %v1237 = vmul.f32 %v1236, 1.442695
    %v1238 = vpow.pop %v1237
    %v1239 = vadd.f32 %v1238, 1.0
    %v1240 = vrcp.pop %v1239
    %v1241 = vmul.f32 1.0, %v1240
    %v1242 = vtanh.pop %v1228
    %v1243 = vxor.u32 %v1229, 2147483648
    %v1244 = vmul.f32 %v1243, 1.442695
    %v1245 = vpow.pop %v1244
    %v1246 = vadd.f32 %v1245, 1.0
    %v1247 = vrcp.pop %v1246
    %v1248 = vmul.f32 1.0, %v1247
    %v1249 = vmul.f32 %v1241, %v1133
    %v1250 = vmul.f32 %v1235, %v1242
    %v1251 = vadd.f32 %v1249, %v1250
    %v1252 = vtanh.pop %v1251
    %v1253 = vmul.f32 %v1248, %v1252
    %s1254 = smul.u32 6, 4
    %s1255 = smul.addr %s1254, 8
    %s1256 = scalar_lea.vmem [#allocation2], %s1255
    %v1257 = vld [vmem:[%s1256] sm:$0xff]
    %v1258 = vld [vmem:[%s1256 + $0x8] sm:$0xff]
    %v1259 = vld [vmem:[%s1256 + $0x10] sm:$0xff]
    %v1260 = vld [vmem:[%s1256 + $0x18] sm:$0xff]
    %v1261 = vpack.c.bf16 %v1253, %v1253
    %1262 = vmatprep.subr.bf16.mxu0 %v519
    %1263 = vmatpush1.bf16.msra.mxu0 %v518
    %1264 = vmatprep.subr.bf16.mxu0 %v515
    %1265 = vmatpush1.bf16.msra.mxu0 %v514
    %1266 = vmatprep.subr.bf16.mxu0 %v511
    %1267 = vmatpush1.bf16.msra.mxu0 %v510
    %1268 = vmatprep.subr.bf16.mxu0 %v507
    %1269 = vmatpush1.bf16.msra.mxu0 %v506
    %1270 = vmatprep.subr.bf16.mxu0 %v503
    %1271 = vmatpush1.bf16.msra.mxu0 %v502
    %1272 = vmatprep.subr.bf16.mxu0 %v499
    %1273 = vmatpush1.bf16.msra.mxu0 %v498
    %1274 = vmatprep.subr.bf16.mxu0 %v495
    %1275 = vmatpush1.bf16.msra.mxu0 %v494
    %1276 = vmatprep.subr.bf16.mxu0 %v491
    %1277 = vmatpush1.bf16.msra.mxu0 %v490
    %1278 = vmatprep.subr.bf16.mxu0 0
    %1279 = vmatpush2.bf16.msra.mxu0 0
    %1280 = vmatprep.subr.bf16.mxu0 0
    %1281 = vmatpush2.bf16.msra.mxu0 0
    %1282 = vmatprep.subr.bf16.mxu0 0
    %1283 = vmatpush2.bf16.msra.mxu0 0
    %1284 = vmatprep.subr.bf16.mxu0 0
    %1285 = vmatpush2.bf16.msra.mxu0 0
    %1286 = vmatprep.subr.bf16.mxu0 0
    %1287 = vmatpush2.bf16.msra.mxu0 0
    %1288 = vmatprep.subr.bf16.mxu0 0
    %1289 = vmatpush2.bf16.msra.mxu0 0
    %1290 = vmatprep.subr.bf16.mxu0 0
    %1291 = vmatpush2.bf16.msra.mxu0 0
    %1292 = vmatprep.subr.bf16.mxu0 0
    %1293 = vmatpush2.bf16.msra.mxu0 0
    %1294 = vmatprep.mubr.bf16.mxu0 0
    %1295 = vmatmul.mubr.bf16.gmra.mxu0 %v1261
    %v1296 = vpop.f32.mrf.mxu0
    %v1297 = vadd.f32 0.0, %v1296
    %v1298 = vpop.f32.mrf.mxu0
    %v1299 = vadd.f32 0.0, %v1298
    %v1300 = vpop.f32.mrf.mxu0
    %v1301 = vpop.f32.mrf.mxu0
    %1302 = vdwg.mxu0
    %1303 = vmatprep.subr.bf16.mxu0 %v521
    %1304 = vmatpush1.bf16.msra.mxu0 %v520
    %1305 = vmatprep.subr.bf16.mxu0 %v517
    %1306 = vmatpush1.bf16.msra.mxu0 %v516
    %1307 = vmatprep.subr.bf16.mxu0 %v513
    %1308 = vmatpush1.bf16.msra.mxu0 %v512
    %1309 = vmatprep.subr.bf16.mxu0 %v509
    %1310 = vmatpush1.bf16.msra.mxu0 %v508
    %1311 = vmatprep.subr.bf16.mxu0 %v505
    %1312 = vmatpush1.bf16.msra.mxu0 %v504
    %1313 = vmatprep.subr.bf16.mxu0 %v501
    %1314 = vmatpush1.bf16.msra.mxu0 %v500
    %1315 = vmatprep.subr.bf16.mxu0 %v497
    %1316 = vmatpush1.bf16.msra.mxu0 %v496
    %1317 = vmatprep.subr.bf16.mxu0 %v493
    %1318 = vmatpush1.bf16.msra.mxu0 %v492
    %1319 = vmatprep.subr.bf16.mxu0 0
    %1320 = vmatpush2.bf16.msra.mxu0 0
    %1321 = vmatprep.subr.bf16.mxu0 0
    %1322 = vmatpush2.bf16.msra.mxu0 0
    %1323 = vmatprep.subr.bf16.mxu0 0
    %1324 = vmatpush2.bf16.msra.mxu0 0
    %1325 = vmatprep.subr.bf16.mxu0 0
    %1326 = vmatpush2.bf16.msra.mxu0 0
    %1327 = vmatprep.subr.bf16.mxu0 0
    %1328 = vmatpush2.bf16.msra.mxu0 0
    %1329 = vmatprep.subr.bf16.mxu0 0
    %1330 = vmatpush2.bf16.msra.mxu0 0
    %1331 = vmatprep.subr.bf16.mxu0 0
    %1332 = vmatpush2.bf16.msra.mxu0 0
    %1333 = vmatprep.subr.bf16.mxu0 0
    %1334 = vmatpush2.bf16.msra.mxu0 0
    %1335 = vmatprep.mubr.bf16.mxu0 0
    %1336 = vmatmul.mubr.bf16.gmra.mxu0 %v1261
    %v1337 = vpop.f32.mrf.mxu0
    %v1338 = vadd.f32 0.0, %v1337
    %v1339 = vpop.f32.mrf.mxu0
    %v1340 = vadd.f32 0.0, %v1339
    %v1341 = vpop.f32.mrf.mxu0
    %v1342 = vpop.f32.mrf.mxu0
    %1343 = vdwg.mxu0
    %v1344 = vadd.f32 %v1257, %v1297
    %v1345 = vadd.f32 %v1258, %v1299
    %v1346 = vadd.f32 %v1259, %v1338
    %v1347 = vadd.f32 %v1260, %v1340
    %v1348 = vxor.u32 %v1344, 2147483648
    %v1349 = vmul.f32 %v1348, 1.442695
    %v1350 = vpow.pop %v1349
    %v1351 = vadd.f32 %v1350, 1.0
    %v1352 = vrcp.pop %v1351
    %v1353 = vmul.f32 1.0, %v1352
    %v1354 = vxor.u32 %v1345, 2147483648
    %v1355 = vmul.f32 %v1354, 1.442695
    %v1356 = vpow.pop %v1355
    %v1357 = vadd.f32 %v1356, 1.0
    %v1358 = vrcp.pop %v1357
    %v1359 = vmul.f32 1.0, %v1358
    %v1360 = vtanh.pop %v1346
    %v1361 = vxor.u32 %v1347, 2147483648
    %v1362 = vmul.f32 %v1361, 1.442695
    %v1363 = vpow.pop %v1362
    %v1364 = vadd.f32 %v1363, 1.0
    %v1365 = vrcp.pop %v1364
    %v1366 = vmul.f32 1.0, %v1365
    %v1367 = vmul.f32 %v1359, %v1251
    %v1368 = vmul.f32 %v1353, %v1360
    %v1369 = vadd.f32 %v1367, %v1368
    %v1370 = vtanh.pop %v1369
    %v1371 = vmul.f32 %v1366, %v1370
    %s1372 = smul.u32 7, 4
    %s1373 = smul.addr %s1372, 8
    %s1374 = scalar_lea.vmem [#allocation2], %s1373
    %v1375 = vld [vmem:[%s1374] sm:$0xff]
    %v1376 = vld [vmem:[%s1374 + $0x8] sm:$0xff]
    %v1377 = vld [vmem:[%s1374 + $0x10] sm:$0xff]
    %v1378 = vld [vmem:[%s1374 + $0x18] sm:$0xff]
    %v1379 = vpack.c.bf16 %v1371, %v1371
    %1380 = vmatprep.subr.bf16.mxu0 %v519
    %1381 = vmatpush1.bf16.msra.mxu0 %v518
    %1382 = vmatprep.subr.bf16.mxu0 %v515
    %1383 = vmatpush1.bf16.msra.mxu0 %v514
    %1384 = vmatprep.subr.bf16.mxu0 %v511
    %1385 = vmatpush1.bf16.msra.mxu0 %v510
    %1386 = vmatprep.subr.bf16.mxu0 %v507
    %1387 = vmatpush1.bf16.msra.mxu0 %v506
    %1388 = vmatprep.subr.bf16.mxu0 %v503
    %1389 = vmatpush1.bf16.msra.mxu0 %v502
    %1390 = vmatprep.subr.bf16.mxu0 %v499
    %1391 = vmatpush1.bf16.msra.mxu0 %v498
    %1392 = vmatprep.subr.bf16.mxu0 %v495
    %1393 = vmatpush1.bf16.msra.mxu0 %v494
    %1394 = vmatprep.subr.bf16.mxu0 %v491
    %1395 = vmatpush1.bf16.msra.mxu0 %v490
    %1396 = vmatprep.subr.bf16.mxu0 0
    %1397 = vmatpush2.bf16.msra.mxu0 0
    %1398 = vmatprep.subr.bf16.mxu0 0
    %1399 = vmatpush2.bf16.msra.mxu0 0
    %1400 = vmatprep.subr.bf16.mxu0 0
    %1401 = vmatpush2.bf16.msra.mxu0 0
    %1402 = vmatprep.subr.bf16.mxu0 0
    %1403 = vmatpush2.bf16.msra.mxu0 0
    %1404 = vmatprep.subr.bf16.mxu0 0
    %1405 = vmatpush2.bf16.msra.mxu0 0
    %1406 = vmatprep.subr.bf16.mxu0 0
    %1407 = vmatpush2.bf16.msra.mxu0 0
    %1408 = vmatprep.subr.bf16.mxu0 0
    %1409 = vmatpush2.bf16.msra.mxu0 0
    %1410 = vmatprep.subr.bf16.mxu0 0
    %1411 = vmatpush2.bf16.msra.mxu0 0
    %1412 = vmatprep.mubr.bf16.mxu0 0
    %1413 = vmatmul.mubr.bf16.gmra.mxu0 %v1379
    %v1414 = vpop.f32.mrf.mxu0
    %v1415 = vadd.f32 0.0, %v1414
    %v1416 = vpop.f32.mrf.mxu0
    %v1417 = vadd.f32 0.0, %v1416
    %v1418 = vpop.f32.mrf.mxu0
    %v1419 = vpop.f32.mrf.mxu0
    %1420 = vdwg.mxu0
    %1421 = vmatprep.subr.bf16.mxu0 %v521
    %1422 = vmatpush1.bf16.msra.mxu0 %v520
    %1423 = vmatprep.subr.bf16.mxu0 %v517
    %1424 = vmatpush1.bf16.msra.mxu0 %v516
    %1425 = vmatprep.subr.bf16.mxu0 %v513
    %1426 = vmatpush1.bf16.msra.mxu0 %v512
    %1427 = vmatprep.subr.bf16.mxu0 %v509
    %1428 = vmatpush1.bf16.msra.mxu0 %v508
    %1429 = vmatprep.subr.bf16.mxu0 %v505
    %1430 = vmatpush1.bf16.msra.mxu0 %v504
    %1431 = vmatprep.subr.bf16.mxu0 %v501
    %1432 = vmatpush1.bf16.msra.mxu0 %v500
    %1433 = vmatprep.subr.bf16.mxu0 %v497
    %1434 = vmatpush1.bf16.msra.mxu0 %v496
    %1435 = vmatprep.subr.bf16.mxu0 %v493
    %1436 = vmatpush1.bf16.msra.mxu0 %v492
    %1437 = vmatprep.subr.bf16.mxu0 0
    %1438 = vmatpush2.bf16.msra.mxu0 0
    %1439 = vmatprep.subr.bf16.mxu0 0
    %1440 = vmatpush2.bf16.msra.mxu0 0
    %1441 = vmatprep.subr.bf16.mxu0 0
    %1442 = vmatpush2.bf16.msra.mxu0 0
    %1443 = vmatprep.subr.bf16.mxu0 0
    %1444 = vmatpush2.bf16.msra.mxu0 0
    %1445 = vmatprep.subr.bf16.mxu0 0
    %1446 = vmatpush2.bf16.msra.mxu0 0
    %1447 = vmatprep.subr.bf16.mxu0 0
    %1448 = vmatpush2.bf16.msra.mxu0 0
    %1449 = vmatprep.subr.bf16.mxu0 0
    %1450 = vmatpush2.bf16.msra.mxu0 0
    %1451 = vmatprep.subr.bf16.mxu0 0
    %1452 = vmatpush2.bf16.msra.mxu0 0
    %1453 = vmatprep.mubr.bf16.mxu0 0
    %1454 = vmatmul.mubr.bf16.gmra.mxu0 %v1379
    %v1455 = vpop.f32.mrf.mxu0
    %v1456 = vadd.f32 0.0, %v1455
    %v1457 = vpop.f32.mrf.mxu0
    %v1458 = vadd.f32 0.0, %v1457
    %v1459 = vpop.f32.mrf.mxu0
    %v1460 = vpop.f32.mrf.mxu0
    %1461 = vdwg.mxu0
    %v1462 = vadd.f32 %v1375, %v1415
    %v1463 = vadd.f32 %v1376, %v1417
    %v1464 = vadd.f32 %v1377, %v1456
    %v1465 = vadd.f32 %v1378, %v1458
    %v1466 = vxor.u32 %v1462, 2147483648
    %v1467 = vmul.f32 %v1466, 1.442695
    %v1468 = vpow.pop %v1467
    %v1469 = vadd.f32 %v1468, 1.0
    %v1470 = vrcp.pop %v1469
    %v1471 = vmul.f32 1.0, %v1470
    %v1472 = vxor.u32 %v1463, 2147483648
    %v1473 = vmul.f32 %v1472, 1.442695
    %v1474 = vpow.pop %v1473
    %v1475 = vadd.f32 %v1474, 1.0
    %v1476 = vrcp.pop %v1475
    %v1477 = vmul.f32 1.0, %v1476
    %v1478 = vtanh.pop %v1464
    %v1479 = vxor.u32 %v1465, 2147483648
    %v1480 = vmul.f32 %v1479, 1.442695
    %v1481 = vpow.pop %v1480
    %v1482 = vadd.f32 %v1481, 1.0
    %v1483 = vrcp.pop %v1482
    %v1484 = vmul.f32 1.0, %v1483
    %v1485 = vmul.f32 %v1477, %v1369
    %v1486 = vmul.f32 %v1471, %v1478
    %v1487 = vadd.f32 %v1485, %v1486
    %v1488 = vtanh.pop %v1487
    %v1489 = vmul.f32 %v1484, %v1488
    %v1490 = vpack.c.bf16 %v1489, %v1489
    %v1491 = vld [vmem:[#allocation8] sm:$0xf]
    %v1492 = vld [vmem:[#allocation8 + $0x4] sm:$0xf]
    %v1493 = vld [vmem:[#allocation8 + $0x8] sm:$0xf]
    %v1494 = vld [vmem:[#allocation8 + $0xc] sm:$0xf]
    %v1495 = vld [vmem:[#allocation8 + $0x10] sm:$0xf]
    %v1496 = vld [vmem:[#allocation8 + $0x14] sm:$0xf]
    %v1497 = vld [vmem:[#allocation8 + $0x18] sm:$0xf]
    %v1498 = vld [vmem:[#allocation8 + $0x1c] sm:$0xf]
    %v1499 = vld [vmem:[#allocation8 + $0x20] sm:$0xf]
    %v1500 = vld [vmem:[#allocation8 + $0x24] sm:$0xf]
    %v1501 = vld [vmem:[#allocation8 + $0x28] sm:$0xf]
    %v1502 = vld [vmem:[#allocation8 + $0x2c] sm:$0xf]
    %v1503 = vld [vmem:[#allocation8 + $0x30] sm:$0xf]
    %v1504 = vld [vmem:[#allocation8 + $0x34] sm:$0xf]
    %v1505 = vld [vmem:[#allocation8 + $0x38] sm:$0xf]
    %v1506 = vld [vmem:[#allocation8 + $0x3c] sm:$0xf]
    %v1507 = vld [vmem:[%s5] sm:$0x1]
    %v1509 = vlaneseq
    %v1510 = vshrl.u32 %v1509, 7
    %v1511 = vsub.s32 0, %v1510
    %v1512 = vrot.slane %v1507, %v1511
    %v1530 = vunpack.c.l.b16 %v1491
    %v1531 = vunpack.c.l.b16 %v1492
    %v1532 = vunpack.c.l.b16 %v1493
    %v1533 = vunpack.c.l.b16 %v1494
    %v1534 = vunpack.c.l.b16 %v1495
    %v1535 = vunpack.c.l.b16 %v1496
    %v1536 = vunpack.c.l.b16 %v1497
    %v1537 = vunpack.c.l.b16 %v1498
    %v1538 = vunpack.c.l.b16 %v1499
    %v1539 = vunpack.c.l.b16 %v1500
    %v1540 = vunpack.c.l.b16 %v1501
    %v1541 = vunpack.c.l.b16 %v1502
    %v1542 = vunpack.c.l.b16 %v1503
    %v1543 = vunpack.c.l.b16 %v1504
    %v1544 = vunpack.c.l.b16 %v1505
    %v1545 = vunpack.c.l.b16 %v1506
    %v1546 = vpack.c.b16 %v1531, %v1530
    %v1547 = vpack.c.b16 %v1533, %v1532
    %v1548 = vpack.c.b16 %v1535, %v1534
    %v1549 = vpack.c.b16 %v1537, %v1536
    %v1550 = vpack.c.b16 %v1539, %v1538
    %v1551 = vpack.c.b16 %v1541, %v1540
    %v1552 = vpack.c.b16 %v1543, %v1542
    %v1553 = vpack.c.b16 %v1545, %v1544
    %1562 = vmatprep.subr.bf16.mxu0 0
    %1563 = vmatpush1.bf16.msra.mxu0 %v1553
    %1564 = vmatprep.subr.bf16.mxu0 0
    %1565 = vmatpush1.bf16.msra.mxu0 %v1552
    %1566 = vmatprep.subr.bf16.mxu0 0
    %1567 = vmatpush1.bf16.msra.mxu0 %v1551
    %1568 = vmatprep.subr.bf16.mxu0 0
    %1569 = vmatpush1.bf16.msra.mxu0 %v1550
    %1570 = vmatprep.subr.bf16.mxu0 0
    %1571 = vmatpush1.bf16.msra.mxu0 %v1549
    %1572 = vmatprep.subr.bf16.mxu0 0
    %1573 = vmatpush1.bf16.msra.mxu0 %v1548
    %1574 = vmatprep.subr.bf16.mxu0 0
    %1575 = vmatpush1.bf16.msra.mxu0 %v1547
    %1576 = vmatprep.subr.bf16.mxu0 0
    %1577 = vmatpush1.bf16.msra.mxu0 %v1546
    %1578 = vmatprep.subr.bf16.mxu0 0
    %1579 = vmatpush2.bf16.msra.mxu0 0
    %1580 = vmatprep.subr.bf16.mxu0 0
    %1581 = vmatpush2.bf16.msra.mxu0 0
    %1582 = vmatprep.subr.bf16.mxu0 0
    %1583 = vmatpush2.bf16.msra.mxu0 0
    %1584 = vmatprep.subr.bf16.mxu0 0
    %1585 = vmatpush2.bf16.msra.mxu0 0
    %1586 = vmatprep.subr.bf16.mxu0 0
    %1587 = vmatpush2.bf16.msra.mxu0 0
    %1588 = vmatprep.subr.bf16.mxu0 0
    %1589 = vmatpush2.bf16.msra.mxu0 0
    %1590 = vmatprep.subr.bf16.mxu0 0
    %1591 = vmatpush2.bf16.msra.mxu0 0
    %1592 = vmatprep.subr.bf16.mxu0 0
    %1593 = vmatpush2.bf16.msra.mxu0 0
    %1594 = vmatprep.mubr.bf16.mxu0 0
    %1595 = vmatmul.mubr.bf16.gmra.mxu0 %v1490
    %v1596 = vpop.f32.mrf.mxu0
    %v1597 = vadd.f32 %v1512, %v1596
    %v1598 = vpop.f32.mrf.mxu0
    %v1599 = vpop.f32.mrf.mxu0
    %v1600 = vpop.f32.mrf.mxu0
    %1601 = vdwg.mxu0
    %1602 = vmax.xlane.f32.xlu0 %v1597
    %v1603 = vpop.xlane.xlu0 %1602
    %v1604 = vsub.f32 %v1597, %v1603
    %v1605 = vmul.f32 %v1604, 1.442695
    %v1606 = vpow.pop %v1605
    %1607 = vadd.xlane.f32.xlu0 %v1606
    %v1608 = vpop.xlane.xlu0 %1607
    %v1609 = vlog2.pop %v1608
    %v1610 = vmul.f32 %v1609, 0.6931472
    %v1611 = vsub.f32 %v1604, %v1610
    %1612 = vst [vmem:[#allocation9] sm:$0xff] %v1611
    // Predicated region
    $region38: #{tpu_custom_call.1} parent=1 // pred_check
      _
    $region39: #{tpu_custom_call.1} parent=1 // pred_check_branch
      %1614 = sbr.rel (0) target = $region41
    $region40: #{tpu_custom_call.1} parent=1 // pred_region
      %s1616 = ssub.s32 128, 128
      %1617 = vsyncadd [#allocation5], %s1616
      %s1619 = sshll.u32 [#allocation9], 4
      %s1620 = int_to_ptr.vmem [resolvable:$true] %s1619
      %1622 = dma.vmem_to_hbm [thread:$0]  %s1620, 128, %s6, [#allocation5]
    $region41: #{tpu_custom_call.1} parent=1 // pred_fallthru
      _
    // Predicated region
    $region42: #{tpu_custom_call.1} parent=1 // pred_check
      _
    $region43: #{tpu_custom_call.1} parent=1 // pred_check_branch
      %1624 = sbr.rel (0) target = $region45
    $region44: #{tpu_custom_call.1} parent=1 // pred_region
      %1625 = dma.done [#allocation5], 128
    $region45: #{tpu_custom_call.1} parent=1 // pred_fallthru
      _
    %1626 = vsyncpa [#allocation4], 1
    %1627 = vsyncpa [#allocation7], 1
    %1628 = vsyncpa [#allocation5], 1

</llo_original>
